<compile_context>
chip_gen: v7x
topology: tpu7x:2x2x1
jax: 0.10.0
libtpu: 0.0.40
codegen_flags: <defaults>
</compile_context>

<pallas_src>
import functools

import jax
import jax.numpy as jnp
from jax import lax
from jax.experimental import pallas as pl
from jax.experimental.pallas import tpu as pltpu


def _round_up(x, m):
    return ((x + m - 1) // m) * m


_GATE_PERM = (0, 1, 3, 2)   # PyTorch gate order [i, f, g, o] -> kernel order [i, f, o, g]


def lstm_classifier_kernel(x_ref, wih_ref, whh_ref, b_ref, wc_ref, bc_ref,
                           out_ref, h_ref, c_ref, gx_ref,
                           *, seq_len, steps_per_chunk, masked_tail):
    """One grid step processes `steps_per_chunk` timesteps of the recurrence.

    x_ref  : (Ts*B8, E)   bf16, time-major rows for this chunk
    gx_ref : (Ts*B8, 4Hp) f32 scratch, hoisted input projection for the chunk
    h_ref, c_ref : (B8, Hp) f32 scratch carried across grid steps
    All packed gate weights/bias use the reordered layout [i, f, o, g].
    """
    chunk = pl.program_id(0)
    B8, Hp = h_ref.shape
    Ts = steps_per_chunk

    @pl.when(chunk == 0)
    def _():
        h_ref[...] = jnp.zeros_like(h_ref)
        c_ref[...] = jnp.zeros_like(c_ref)
        out_ref[...] = jnp.zeros_like(out_ref)

    # (1) Input projection for the whole chunk: one bf16 MXU matmul, f32 acc,
    #     stored to VMEM scratch so the per-step loop does aligned (B8, 4Hp) loads.
    gx_ref[...] = jnp.dot(x_ref[...], wih_ref[...],
                          preferred_element_type=jnp.float32) + b_ref[...]

    whh = whh_ref[...]                                     # (Hp, 4Hp) bf16, hoisted

    # (2) Recurrence over the chunk: one small recurrent dot per step; fori_loop
    #     bounds liveness, chunk size bounds the unroll.
    def step(t, carry):
        h, c = carry
        start = pl.multiple_of(t * B8, B8)
        gates = gx_ref[pl.ds(start, B8), :] + jnp.dot(
            h.astype(jnp.bfloat16), whh, preferred_element_type=jnp.float32)
        sig = jax.nn.sigmoid(gates[:, :3 * Hp])            # [i | f | o] in one pass
        i_g = sig[:, 0 * Hp:1 * Hp]
        f_g = sig[:, 1 * Hp:2 * Hp]
        o_g = sig[:, 2 * Hp:3 * Hp]
        g_g = jnp.tanh(gates[:, 3 * Hp:4 * Hp])
        c_new = f_g * c + i_g * g_g
        h_new = o_g * jnp.tanh(c_new)
        if masked_tail:
            # Skip zero-padded trailing timesteps (only emitted when S % Ts != 0).
            valid = (chunk * Ts + t) < seq_len
            h_new = jnp.where(valid, h_new, h)
            c_new = jnp.where(valid, c_new, c)
        return h_new, c_new

    h_fin, c_fin = lax.fori_loop(0, Ts, step, (h_ref[...], c_ref[...]),
                                 unroll=True)
    h_ref[...] = h_fin
    c_ref[...] = c_fin

    # (3) Classifier on the final hidden state, only on the last chunk.
    # TODO(synk): Dropout(0.3) is identity in inference/eval mode; modeled as a no-op.
    @pl.when(chunk == pl.num_programs(0) - 1)
    def _():
        logits = jnp.dot(h_fin.astype(jnp.bfloat16), wc_ref[...],
                         preferred_element_type=jnp.float32) + bc_ref[...]
        out_ref[...] = logits.astype(out_ref.dtype)


def _prepare_weights(params, Hp, Cp):
    """Reorder gate blocks to [i, f, o, g], zero-pad each gate block to Hp and the
    classifier to (Hp, Cp), transpose for right-multiplication, cast matmul
    operands to bf16.  Zero padding keeps padded h/c lanes exactly zero."""
    w_ih, w_hh = params["w_ih"], params["w_hh"]            # (4H, E), (4H, H)
    b_ih, b_hh = params["b_ih"], params["b_hh"]            # (4H,)
    w_cls, b_cls = params["w_cls"], params["b_cls"]        # (C, H), (C,)
    H = w_hh.shape[1]
    C = w_cls.shape[0]
    perm = jnp.asarray(_GATE_PERM)

    def reorder_pad_rows(w):                               # (4H, K) -> (4Hp, K)
        K = w.shape[1]
        w4 = jnp.take(w.reshape(4, H, K), perm, axis=0)
        w4 = jnp.pad(w4, ((0, 0), (0, Hp - H), (0, 0)))
        return w4.reshape(4 * Hp, K)

    wih_t = jnp.transpose(reorder_pad_rows(w_ih)).astype(jnp.bfloat16)          # (E, 4Hp)
    whh_p = jnp.pad(reorder_pad_rows(w_hh), ((0, 0), (0, Hp - H)))              # (4Hp, Hp)
    whh_t = jnp.transpose(whh_p).astype(jnp.bfloat16)                           # (Hp, 4Hp)
    bias = jnp.take((b_ih + b_hh).reshape(4, H), perm, axis=0)
    bias = jnp.pad(bias, ((0, 0), (0, Hp - H))).reshape(1, 4 * Hp).astype(jnp.float32)
    wc_t = jnp.transpose(jnp.pad(w_cls, ((0, Cp - C), (0, Hp - H)))).astype(jnp.bfloat16)  # (Hp, Cp)
    bc = jnp.pad(b_cls, (0, Cp - C)).reshape(1, Cp).astype(jnp.float32)          # (1, Cp)
    return wih_t, whh_t, bias, wc_t, bc


def text_classifier_forward(token_ids, params, *, chunk_steps=16):
    """token_ids: (B, S) int32.  Returns logits (B, num_classes) float32."""
    emb_table = params["embedding"]                        # (V, E)
    B, S = token_ids.shape
    E = emb_table.shape[1]
    H = params["w_hh"].shape[1]
    C = params["w_cls"].shape[0]
    Hp = _round_up(H, 128)                                 # lane-aligned hidden dim
    Cp = _round_up(C, 128)                                 # lane-dense output width
    B8 = _round_up(B, 8)                                   # f32 sublane-aligned batch
    Ts = min(chunk_steps, S)                               # timesteps per grid step
    num_chunks = pl.cdiv(S, Ts)
    S_pad = num_chunks * Ts

    wih_t, whh_t, bias, wc_t, bc = _prepare_weights(params, Hp, Cp)

    # Embedding gather emitted directly time-major (transpose the tiny id matrix,
    # not the activation tensor); batch/time padded so every per-step slice in the
    # kernel is a whole vreg-aligned block.
    # TODO(synk): fold the gather into the kernel (scalar-prefetch ids + per-row
    # DMA from the HBM embedding table) to avoid the extra HBM round trip.
    emb = jnp.take(emb_table, token_ids.T, axis=0)         # (S, B, E)
    emb = jnp.pad(emb, ((0, S_pad - S), (0, B8 - B), (0, 0)))
    x_flat = emb.reshape(S_pad * B8, E).astype(jnp.bfloat16)

    kernel = functools.partial(
        lstm_classifier_kernel,
        seq_len=S, steps_per_chunk=Ts, masked_tail=(S_pad != S))

    grid_spec = pltpu.PrefetchScalarGridSpec(
        num_scalar_prefetch=0,
        grid=(num_chunks,),
        in_specs=[
            pl.BlockSpec((Ts * B8, E), lambda i: (i, 0)),       # x chunk (pipelined)
            pl.BlockSpec((E, 4 * Hp), lambda i: (0, 0)),        # weights: resident
            pl.BlockSpec((Hp, 4 * Hp), lambda i: (0, 0)),
            pl.BlockSpec((1, 4 * Hp), lambda i: (0, 0)),
            pl.BlockSpec((Hp, Cp), lambda i: (0, 0)),
            pl.BlockSpec((1, Cp), lambda i: (0, 0)),
        ],
        out_specs=pl.BlockSpec((B8, Cp), lambda i: (0, 0)),
        scratch_shapes=[
            pltpu.VMEM((B8, Hp), jnp.float32),                  # h carry
            pltpu.VMEM((B8, Hp), jnp.float32),                  # c carry
            pltpu.VMEM((Ts * B8, 4 * Hp), jnp.float32),         # gates_x chunk
        ],
    )

    out = pl.pallas_call(
        kernel,
        out_shape=jax.ShapeDtypeStruct((B8, Cp), jnp.float32),
        grid_spec=grid_spec,
        compiler_params=pltpu.CompilerParams(
            dimension_semantics=("arbitrary",),                 # recurrence carries h/c
            vmem_limit_bytes=32 * 1024 * 1024,
        ),
    )(x_flat, wih_t, whh_t, bias, wc_t, bc)
    return out[:B, :C]


def _reference_forward(token_ids, params):
    """Pure-JAX f32 reference matching PyTorch LSTM semantics."""
    emb = jnp.take(params["embedding"], token_ids, axis=0)     # (B, S, E)
    B = token_ids.shape[0]
    H = params["w_hh"].shape[1]

    def cell(carry, x_t):
        h, c = carry
        gates = (x_t @ params["w_ih"].T + h @ params["w_hh"].T
                 + params["b_ih"] + params["b_hh"])
        i, f, g, o = jnp.split(gates, 4, axis=-1)
        c = jax.nn.sigmoid(f) * c + jax.nn.sigmoid(i) * jnp.tanh(g)
        h = jax.nn.sigmoid(o) * jnp.tanh(c)
        return (h, c), None

    init = (jnp.zeros((B, H), jnp.float32), jnp.zeros((B, H), jnp.float32))
    (h_last, _), _ = jax.lax.scan(cell, init, jnp.transpose(emb, (1, 0, 2)))
    return h_last @ params["w_cls"].T + params["b_cls"]


def init_params(key, vocab_size, embed_dim=128, hidden_dim=64, num_classes=2):
    ks = jax.random.split(key, 7)
    scale = 0.1
    return {
        "embedding": scale * jax.random.normal(ks[0], (vocab_size, embed_dim), jnp.float32),
        "w_ih": scale * jax.random.normal(ks[1], (4 * hidden_dim, embed_dim), jnp.float32),
        "w_hh": scale * jax.random.normal(ks[2], (4 * hidden_dim, hidden_dim), jnp.float32),
        "b_ih": scale * jax.random.normal(ks[3], (4 * hidden_dim,), jnp.float32),
        "b_hh": scale * jax.random.normal(ks[4], (4 * hidden_dim,), jnp.float32),
        "w_cls": scale * jax.random.normal(ks[5], (num_classes, hidden_dim), jnp.float32),
        "b_cls": scale * jax.random.normal(ks[6], (num_classes,), jnp.float32),
    }


if __name__ == "__main__":
    key = jax.random.PRNGKey(0)
    vocab_size, embed_dim, hidden_dim, num_classes = 50, 128, 64, 2
    batch, seq = 2, 8

    kp, kx = jax.random.split(key)
    params = init_params(kp, vocab_size, embed_dim, hidden_dim, num_classes)
    token_ids = jax.random.randint(kx, (batch, seq), 0, vocab_size, dtype=jnp.int32)

    logits = text_classifier_forward(token_ids, params)
    jax.block_until_ready(logits)
    assert logits.shape == (batch, num_classes)

    ref = _reference_forward(token_ids, params)
    assert jnp.allclose(logits, ref, atol=5e-2, rtol=5e-2)
    print("KERNEL_OK")
</pallas_src>

<mosaic_0001>
module attributes {stable_mosaic.version = 11 : i64} {
  func.func @lstm_classifier_kernel(%arg0: i32, %arg1: memref<64x128xbf16, #tpu.memory_space<vmem>>, %arg2: memref<128x512xbf16, #tpu.memory_space<vmem>>, %arg3: memref<128x512xbf16, #tpu.memory_space<vmem>>, %arg4: memref<1x512xf32, #tpu.memory_space<vmem>>, %arg5: memref<128x128xbf16, #tpu.memory_space<vmem>>, %arg6: memref<1x128xf32, #tpu.memory_space<vmem>>, %arg7: memref<8x128xf32, #tpu.memory_space<vmem>>, %arg8: memref<8x128xf32, #tpu.memory_space<vmem>>, %arg9: memref<8x128xf32, #tpu.memory_space<vmem>>, %arg10: memref<64x512xf32, #tpu.memory_space<vmem>>) attributes {dimension_semantics = [#tpu.dimension_semantics<arbitrary>], iteration_bounds = array<i64: 1>, scalar_prefetch = 0 : i64, scratch_operands = 3 : i64, tpu.core_type = #tpu.core_type<tc>, window_params = [{transform_indices = @transform_0, window_bounds = array<i64: 64, 128>}, {pipeline_mode = #tpu.pipeline_mode<synchronous>, transform_indices = @transform_1, window_bounds = array<i64: 128, 512>}, {pipeline_mode = #tpu.pipeline_mode<synchronous>, transform_indices = @transform_2, window_bounds = array<i64: 128, 512>}, {pipeline_mode = #tpu.pipeline_mode<synchronous>, transform_indices = @transform_3, window_bounds = array<i64: 1, 512>}, {pipeline_mode = #tpu.pipeline_mode<synchronous>, transform_indices = @transform_4, window_bounds = array<i64: 128, 128>}, {pipeline_mode = #tpu.pipeline_mode<synchronous>, transform_indices = @transform_5, window_bounds = array<i64: 1, 128>}, {pipeline_mode = #tpu.pipeline_mode<synchronous>, transform_indices = @transform_6, window_bounds = array<i64: 8, 128>}]} {
    %c0_i32 = arith.constant 0 : i32
    %0 = arith.cmpi eq, %arg0, %c0_i32 : i32
    %1 = arith.extui %0 : i1 to i32
    %c0_i32_0 = arith.constant 0 : i32
    %2 = arith.cmpi ne, %1, %c0_i32_0 : i32
    scf.if %2 {
      %cst_53 = arith.constant 0.000000e+00 : f32
      %202 = vector.broadcast %cst_53 : f32 to vector<8x128xf32>
      %c0_54 = arith.constant 0 : index
      %c0_55 = arith.constant 0 : index
      %203 = vector.load %arg8[%c0_54, %c0_55] : memref<8x128xf32, #tpu.memory_space<vmem>>, vector<8x128xf32>
      tpu.vector_store %arg8[%c0_54, %c0_55], %202 {strides = array<i32>} : memref<8x128xf32, #tpu.memory_space<vmem>>, vector<8x128xf32>,
      %cst_56 = arith.constant 0.000000e+00 : f32
      %204 = vector.broadcast %cst_56 : f32 to vector<8x128xf32>
      %c0_57 = arith.constant 0 : index
      %c0_58 = arith.constant 0 : index
      %205 = vector.load %arg9[%c0_57, %c0_58] : memref<8x128xf32, #tpu.memory_space<vmem>>, vector<8x128xf32>
      tpu.vector_store %arg9[%c0_57, %c0_58], %204 {strides = array<i32>} : memref<8x128xf32, #tpu.memory_space<vmem>>, vector<8x128xf32>,
      %cst_59 = arith.constant 0.000000e+00 : f32
      %206 = vector.broadcast %cst_59 : f32 to vector<8x128xf32>
      %c0_60 = arith.constant 0 : index
      %c0_61 = arith.constant 0 : index
      %207 = vector.load %arg7[%c0_60, %c0_61] : memref<8x128xf32, #tpu.memory_space<vmem>>, vector<8x128xf32>
      tpu.vector_store %arg7[%c0_60, %c0_61], %206 {strides = array<i32>} : memref<8x128xf32, #tpu.memory_space<vmem>>, vector<8x128xf32>,
    } else {
    }
    %c0 = arith.constant 0 : index
    %c0_1 = arith.constant 0 : index
    %3 = vector.load %arg1[%c0, %c0_1] : memref<64x128xbf16, #tpu.memory_space<vmem>>, vector<64x128xbf16>
    %c0_2 = arith.constant 0 : index
    %c0_3 = arith.constant 0 : index
    %4 = vector.load %arg2[%c0_2, %c0_3] : memref<128x512xbf16, #tpu.memory_space<vmem>>, vector<128x512xbf16>
    %cst = arith.constant dense<0.000000e+00> : vector<64x512xf32>
    %5 = tpu.matmul %3, %4, %cst {dimension_numbers = #tpu.dot_dimension_numbers<[1], [0], [0], [1], [0, 0, 1, 1], [], []>} : vector<64x128xbf16>, vector<128x512xbf16>, vector<64x512xf32> -> vector<64x512xf32>
    %c0_4 = arith.constant 0 : index
    %c0_5 = arith.constant 0 : index
    %6 = vector.load %arg4[%c0_4, %c0_5] : memref<1x512xf32, #tpu.memory_space<vmem>>, vector<1x512xf32>
    %7 = vector.broadcast %6 : vector<1x512xf32> to vector<64x512xf32>
    %8 = arith.addf %5, %7 : vector<64x512xf32>
    %c0_6 = arith.constant 0 : index
    %c0_7 = arith.constant 0 : index
    %9 = vector.load %arg10[%c0_6, %c0_7] : memref<64x512xf32, #tpu.memory_space<vmem>>, vector<64x512xf32>
    tpu.vector_store %arg10[%c0_6, %c0_7], %8 {strides = array<i32>} : memref<64x512xf32, #tpu.memory_space<vmem>>, vector<64x512xf32>,
    %c0_8 = arith.constant 0 : index
    %c0_9 = arith.constant 0 : index
    %10 = vector.load %arg3[%c0_8, %c0_9] : memref<128x512xbf16, #tpu.memory_space<vmem>>, vector<128x512xbf16>
    %c0_10 = arith.constant 0 : index
    %c0_11 = arith.constant 0 : index
    %11 = vector.load %arg8[%c0_10, %c0_11] : memref<8x128xf32, #tpu.memory_space<vmem>>, vector<8x128xf32>
    %c0_12 = arith.constant 0 : index
    %c0_13 = arith.constant 0 : index
    %12 = vector.load %arg9[%c0_12, %c0_13] : memref<8x128xf32, #tpu.memory_space<vmem>>, vector<8x128xf32>
    %c0_i32_14 = arith.constant 0 : i32
    %c8_i32 = arith.constant 8 : i32
    %13 = arith.muli %c0_i32_14, %c8_i32 : i32
    %14 = tpu.assume_multiple %13, 8 : i32
    %15 = arith.index_cast %14 : i32 to index
    %c0_15 = arith.constant 0 : index
    %16 = vector.load %arg10[%15, %c0_15] : memref<64x512xf32, #tpu.memory_space<vmem>>, vector<8x512xf32>
    %17 = arith.truncf %11 : vector<8x128xf32> to vector<8x128xbf16>
    %cst_16 = arith.constant dense<0.000000e+00> : vector<8x512xf32>
    %18 = tpu.matmul %17, %10, %cst_16 {dimension_numbers = #tpu.dot_dimension_numbers<[1], [0], [0], [1], [0, 0, 1, 1], [], []>} : vector<8x128xbf16>, vector<128x512xbf16>, vector<8x512xf32> -> vector<8x512xf32>
    %19 = arith.addf %16, %18 : vector<8x512xf32>
    %20 = vector.extract_strided_slice %19 {offsets = [0, 0], sizes = [8, 384], strides = [1, 1]} : vector<8x512xf32> to vector<8x384xf32>
    %21 = arith.negf %20 : vector<8x384xf32>
    %22 = math.exp %21 : vector<8x384xf32>
    %cst_17 = arith.constant 1.000000e+00 : f32
    %23 = vector.broadcast %cst_17 : f32 to vector<8x384xf32>
    %24 = arith.addf %23, %22 : vector<8x384xf32>
    %25 = arith.divf %23, %24 : vector<8x384xf32>
    %26 = vector.extract_strided_slice %25 {offsets = [0, 0], sizes = [8, 128], strides = [1, 1]} : vector<8x384xf32> to vector<8x128xf32>
    %27 = vector.extract_strided_slice %25 {offsets = [0, 128], sizes = [8, 128], strides = [1, 1]} : vector<8x384xf32> to vector<8x128xf32>
    %28 = vector.extract_strided_slice %25 {offsets = [0, 256], sizes = [8, 128], strides = [1, 1]} : vector<8x384xf32> to vector<8x128xf32>
    %29 = vector.extract_strided_slice %19 {offsets = [0, 384], sizes = [8, 128], strides = [1, 1]} : vector<8x512xf32> to vector<8x128xf32>
    %30 = math.tanh %29 : vector<8x128xf32>
    %31 = arith.mulf %27, %12 : vector<8x128xf32>
    %32 = arith.mulf %26, %30 : vector<8x128xf32>
    %33 = arith.addf %31, %32 : vector<8x128xf32>
    %34 = math.tanh %33 : vector<8x128xf32>
    %35 = arith.mulf %28, %34 : vector<8x128xf32>
    %c1_i32 = arith.constant 1 : i32
    %c8_i32_18 = arith.constant 8 : i32
    %36 = arith.muli %c1_i32, %c8_i32_18 : i32
    %37 = tpu.assume_multiple %36, 8 : i32
    %38 = arith.index_cast %37 : i32 to index
    %c0_19 = arith.constant 0 : index
    %39 = vector.load %arg10[%38, %c0_19] : memref<64x512xf32, #tpu.memory_space<vmem>>, vector<8x512xf32>
    %40 = arith.truncf %35 : vector<8x128xf32> to vector<8x128xbf16>
    %cst_20 = arith.constant dense<0.000000e+00> : vector<8x512xf32>
    %41 = tpu.matmul %40, %10, %cst_20 {dimension_numbers = #tpu.dot_dimension_numbers<[1], [0], [0], [1], [0, 0, 1, 1], [], []>} : vector<8x128xbf16>, vector<128x512xbf16>, vector<8x512xf32> -> vector<8x512xf32>
    %42 = arith.addf %39, %41 : vector<8x512xf32>
    %43 = vector.extract_strided_slice %42 {offsets = [0, 0], sizes = [8, 384], strides = [1, 1]} : vector<8x512xf32> to vector<8x384xf32>
    %44 = arith.negf %43 : vector<8x384xf32>
    %45 = math.exp %44 : vector<8x384xf32>
    %cst_21 = arith.constant 1.000000e+00 : f32
    %46 = vector.broadcast %cst_21 : f32 to vector<8x384xf32>
    %47 = arith.addf %46, %45 : vector<8x384xf32>
    %48 = arith.divf %46, %47 : vector<8x384xf32>
    %49 = vector.extract_strided_slice %48 {offsets = [0, 0], sizes = [8, 128], strides = [1, 1]} : vector<8x384xf32> to vector<8x128xf32>
    %50 = vector.extract_strided_slice %48 {offsets = [0, 128], sizes = [8, 128], strides = [1, 1]} : vector<8x384xf32> to vector<8x128xf32>
    %51 = vector.extract_strided_slice %48 {offsets = [0, 256], sizes = [8, 128], strides = [1, 1]} : vector<8x384xf32> to vector<8x128xf32>
    %52 = vector.extract_strided_slice %42 {offsets = [0, 384], sizes = [8, 128], strides = [1, 1]} : vector<8x512xf32> to vector<8x128xf32>
    %53 = math.tanh %52 : vector<8x128xf32>
    %54 = arith.mulf %50, %33 : vector<8x128xf32>
    %55 = arith.mulf %49, %53 : vector<8x128xf32>
    %56 = arith.addf %54, %55 : vector<8x128xf32>
    %57 = math.tanh %56 : vector<8x128xf32>
    %58 = arith.mulf %51, %57 : vector<8x128xf32>
    %c2_i32 = arith.constant 2 : i32
    %c8_i32_22 = arith.constant 8 : i32
    %59 = arith.muli %c2_i32, %c8_i32_22 : i32
    %60 = tpu.assume_multiple %59, 8 : i32
    %61 = arith.index_cast %60 : i32 to index
    %c0_23 = arith.constant 0 : index
    %62 = vector.load %arg10[%61, %c0_23] : memref<64x512xf32, #tpu.memory_space<vmem>>, vector<8x512xf32>
    %63 = arith.truncf %58 : vector<8x128xf32> to vector<8x128xbf16>
    %cst_24 = arith.constant dense<0.000000e+00> : vector<8x512xf32>
    %64 = tpu.matmul %63, %10, %cst_24 {dimension_numbers = #tpu.dot_dimension_numbers<[1], [0], [0], [1], [0, 0, 1, 1], [], []>} : vector<8x128xbf16>, vector<128x512xbf16>, vector<8x512xf32> -> vector<8x512xf32>
    %65 = arith.addf %62, %64 : vector<8x512xf32>
    %66 = vector.extract_strided_slice %65 {offsets = [0, 0], sizes = [8, 384], strides = [1, 1]} : vector<8x512xf32> to vector<8x384xf32>
    %67 = arith.negf %66 : vector<8x384xf32>
    %68 = math.exp %67 : vector<8x384xf32>
    %cst_25 = arith.constant 1.000000e+00 : f32
    %69 = vector.broadcast %cst_25 : f32 to vector<8x384xf32>
    %70 = arith.addf %69, %68 : vector<8x384xf32>
    %71 = arith.divf %69, %70 : vector<8x384xf32>
    %72 = vector.extract_strided_slice %71 {offsets = [0, 0], sizes = [8, 128], strides = [1, 1]} : vector<8x384xf32> to vector<8x128xf32>
    %73 = vector.extract_strided_slice %71 {offsets = [0, 128], sizes = [8, 128], strides = [1, 1]} : vector<8x384xf32> to vector<8x128xf32>
    %74 = vector.extract_strided_slice %71 {offsets = [0, 256], sizes = [8, 128], strides = [1, 1]} : vector<8x384xf32> to vector<8x128xf32>
    %75 = vector.extract_strided_slice %65 {offsets = [0, 384], sizes = [8, 128], strides = [1, 1]} : vector<8x512xf32> to vector<8x128xf32>
    %76 = math.tanh %75 : vector<8x128xf32>
    %77 = arith.mulf %73, %56 : vector<8x128xf32>
    %78 = arith.mulf %72, %76 : vector<8x128xf32>
    %79 = arith.addf %77, %78 : vector<8x128xf32>
    %80 = math.tanh %79 : vector<8x128xf32>
    %81 = arith.mulf %74, %80 : vector<8x128xf32>
    %c3_i32 = arith.constant 3 : i32
    %c8_i32_26 = arith.constant 8 : i32
    %82 = arith.muli %c3_i32, %c8_i32_26 : i32
    %83 = tpu.assume_multiple %82, 8 : i32
    %84 = arith.index_cast %83 : i32 to index
    %c0_27 = arith.constant 0 : index
    %85 = vector.load %arg10[%84, %c0_27] : memref<64x512xf32, #tpu.memory_space<vmem>>, vector<8x512xf32>
    %86 = arith.truncf %81 : vector<8x128xf32> to vector<8x128xbf16>
    %cst_28 = arith.constant dense<0.000000e+00> : vector<8x512xf32>
    %87 = tpu.matmul %86, %10, %cst_28 {dimension_numbers = #tpu.dot_dimension_numbers<[1], [0], [0], [1], [0, 0, 1, 1], [], []>} : vector<8x128xbf16>, vector<128x512xbf16>, vector<8x512xf32> -> vector<8x512xf32>
    %88 = arith.addf %85, %87 : vector<8x512xf32>
    %89 = vector.extract_strided_slice %88 {offsets = [0, 0], sizes = [8, 384], strides = [1, 1]} : vector<8x512xf32> to vector<8x384xf32>
    %90 = arith.negf %89 : vector<8x384xf32>
    %91 = math.exp %90 : vector<8x384xf32>
    %cst_29 = arith.constant 1.000000e+00 : f32
    %92 = vector.broadcast %cst_29 : f32 to vector<8x384xf32>
    %93 = arith.addf %92, %91 : vector<8x384xf32>
    %94 = arith.divf %92, %93 : vector<8x384xf32>
    %95 = vector.extract_strided_slice %94 {offsets = [0, 0], sizes = [8, 128], strides = [1, 1]} : vector<8x384xf32> to vector<8x128xf32>
    %96 = vector.extract_strided_slice %94 {offsets = [0, 128], sizes = [8, 128], strides = [1, 1]} : vector<8x384xf32> to vector<8x128xf32>
    %97 = vector.extract_strided_slice %94 {offsets = [0, 256], sizes = [8, 128], strides = [1, 1]} : vector<8x384xf32> to vector<8x128xf32>
    %98 = vector.extract_strided_slice %88 {offsets = [0, 384], sizes = [8, 128], strides = [1, 1]} : vector<8x512xf32> to vector<8x128xf32>
    %99 = math.tanh %98 : vector<8x128xf32>
    %100 = arith.mulf %96, %79 : vector<8x128xf32>
    %101 = arith.mulf %95, %99 : vector<8x128xf32>
    %102 = arith.addf %100, %101 : vector<8x128xf32>
    %103 = math.tanh %102 : vector<8x128xf32>
    %104 = arith.mulf %97, %103 : vector<8x128xf32>
    %c4_i32 = arith.constant 4 : i32
    %c8_i32_30 = arith.constant 8 : i32
    %105 = arith.muli %c4_i32, %c8_i32_30 : i32
    %106 = tpu.assume_multiple %105, 8 : i32
    %107 = arith.index_cast %106 : i32 to index
    %c0_31 = arith.constant 0 : index
    %108 = vector.load %arg10[%107, %c0_31] : memref<64x512xf32, #tpu.memory_space<vmem>>, vector<8x512xf32>
    %109 = arith.truncf %104 : vector<8x128xf32> to vector<8x128xbf16>
    %cst_32 = arith.constant dense<0.000000e+00> : vector<8x512xf32>
    %110 = tpu.matmul %109, %10, %cst_32 {dimension_numbers = #tpu.dot_dimension_numbers<[1], [0], [0], [1], [0, 0, 1, 1], [], []>} : vector<8x128xbf16>, vector<128x512xbf16>, vector<8x512xf32> -> vector<8x512xf32>
    %111 = arith.addf %108, %110 : vector<8x512xf32>
    %112 = vector.extract_strided_slice %111 {offsets = [0, 0], sizes = [8, 384], strides = [1, 1]} : vector<8x512xf32> to vector<8x384xf32>
    %113 = arith.negf %112 : vector<8x384xf32>
    %114 = math.exp %113 : vector<8x384xf32>
    %cst_33 = arith.constant 1.000000e+00 : f32
    %115 = vector.broadcast %cst_33 : f32 to vector<8x384xf32>
    %116 = arith.addf %115, %114 : vector<8x384xf32>
    %117 = arith.divf %115, %116 : vector<8x384xf32>
    %118 = vector.extract_strided_slice %117 {offsets = [0, 0], sizes = [8, 128], strides = [1, 1]} : vector<8x384xf32> to vector<8x128xf32>
    %119 = vector.extract_strided_slice %117 {offsets = [0, 128], sizes = [8, 128], strides = [1, 1]} : vector<8x384xf32> to vector<8x128xf32>
    %120 = vector.extract_strided_slice %117 {offsets = [0, 256], sizes = [8, 128], strides = [1, 1]} : vector<8x384xf32> to vector<8x128xf32>
    %121 = vector.extract_strided_slice %111 {offsets = [0, 384], sizes = [8, 128], strides = [1, 1]} : vector<8x512xf32> to vector<8x128xf32>
    %122 = math.tanh %121 : vector<8x128xf32>
    %123 = arith.mulf %119, %102 : vector<8x128xf32>
    %124 = arith.mulf %118, %122 : vector<8x128xf32>
    %125 = arith.addf %123, %124 : vector<8x128xf32>
    %126 = math.tanh %125 : vector<8x128xf32>
    %127 = arith.mulf %120, %126 : vector<8x128xf32>
    %c5_i32 = arith.constant 5 : i32
    %c8_i32_34 = arith.constant 8 : i32
    %128 = arith.muli %c5_i32, %c8_i32_34 : i32
    %129 = tpu.assume_multiple %128, 8 : i32
    %130 = arith.index_cast %129 : i32 to index
    %c0_35 = arith.constant 0 : index
    %131 = vector.load %arg10[%130, %c0_35] : memref<64x512xf32, #tpu.memory_space<vmem>>, vector<8x512xf32>
    %132 = arith.truncf %127 : vector<8x128xf32> to vector<8x128xbf16>
    %cst_36 = arith.constant dense<0.000000e+00> : vector<8x512xf32>
    %133 = tpu.matmul %132, %10, %cst_36 {dimension_numbers = #tpu.dot_dimension_numbers<[1], [0], [0], [1], [0, 0, 1, 1], [], []>} : vector<8x128xbf16>, vector<128x512xbf16>, vector<8x512xf32> -> vector<8x512xf32>
    %134 = arith.addf %131, %133 : vector<8x512xf32>
    %135 = vector.extract_strided_slice %134 {offsets = [0, 0], sizes = [8, 384], strides = [1, 1]} : vector<8x512xf32> to vector<8x384xf32>
    %136 = arith.negf %135 : vector<8x384xf32>
    %137 = math.exp %136 : vector<8x384xf32>
    %cst_37 = arith.constant 1.000000e+00 : f32
    %138 = vector.broadcast %cst_37 : f32 to vector<8x384xf32>
    %139 = arith.addf %138, %137 : vector<8x384xf32>
    %140 = arith.divf %138, %139 : vector<8x384xf32>
    %141 = vector.extract_strided_slice %140 {offsets = [0, 0], sizes = [8, 128], strides = [1, 1]} : vector<8x384xf32> to vector<8x128xf32>
    %142 = vector.extract_strided_slice %140 {offsets = [0, 128], sizes = [8, 128], strides = [1, 1]} : vector<8x384xf32> to vector<8x128xf32>
    %143 = vector.extract_strided_slice %140 {offsets = [0, 256], sizes = [8, 128], strides = [1, 1]} : vector<8x384xf32> to vector<8x128xf32>
    %144 = vector.extract_strided_slice %134 {offsets = [0, 384], sizes = [8, 128], strides = [1, 1]} : vector<8x512xf32> to vector<8x128xf32>
    %145 = math.tanh %144 : vector<8x128xf32>
    %146 = arith.mulf %142, %125 : vector<8x128xf32>
    %147 = arith.mulf %141, %145 : vector<8x128xf32>
    %148 = arith.addf %146, %147 : vector<8x128xf32>
    %149 = math.tanh %148 : vector<8x128xf32>
    %150 = arith.mulf %143, %149 : vector<8x128xf32>
    %c6_i32 = arith.constant 6 : i32
    %c8_i32_38 = arith.constant 8 : i32
    %151 = arith.muli %c6_i32, %c8_i32_38 : i32
    %152 = tpu.assume_multiple %151, 8 : i32
    %153 = arith.index_cast %152 : i32 to index
    %c0_39 = arith.constant 0 : index
    %154 = vector.load %arg10[%153, %c0_39] : memref<64x512xf32, #tpu.memory_space<vmem>>, vector<8x512xf32>
    %155 = arith.truncf %150 : vector<8x128xf32> to vector<8x128xbf16>
    %cst_40 = arith.constant dense<0.000000e+00> : vector<8x512xf32>
    %156 = tpu.matmul %155, %10, %cst_40 {dimension_numbers = #tpu.dot_dimension_numbers<[1], [0], [0], [1], [0, 0, 1, 1], [], []>} : vector<8x128xbf16>, vector<128x512xbf16>, vector<8x512xf32> -> vector<8x512xf32>
    %157 = arith.addf %154, %156 : vector<8x512xf32>
    %158 = vector.extract_strided_slice %157 {offsets = [0, 0], sizes = [8, 384], strides = [1, 1]} : vector<8x512xf32> to vector<8x384xf32>
    %159 = arith.negf %158 : vector<8x384xf32>
    %160 = math.exp %159 : vector<8x384xf32>
    %cst_41 = arith.constant 1.000000e+00 : f32
    %161 = vector.broadcast %cst_41 : f32 to vector<8x384xf32>
    %162 = arith.addf %161, %160 : vector<8x384xf32>
    %163 = arith.divf %161, %162 : vector<8x384xf32>
    %164 = vector.extract_strided_slice %163 {offsets = [0, 0], sizes = [8, 128], strides = [1, 1]} : vector<8x384xf32> to vector<8x128xf32>
    %165 = vector.extract_strided_slice %163 {offsets = [0, 128], sizes = [8, 128], strides = [1, 1]} : vector<8x384xf32> to vector<8x128xf32>
    %166 = vector.extract_strided_slice %163 {offsets = [0, 256], sizes = [8, 128], strides = [1, 1]} : vector<8x384xf32> to vector<8x128xf32>
    %167 = vector.extract_strided_slice %157 {offsets = [0, 384], sizes = [8, 128], strides = [1, 1]} : vector<8x512xf32> to vector<8x128xf32>
    %168 = math.tanh %167 : vector<8x128xf32>
    %169 = arith.mulf %165, %148 : vector<8x128xf32>
    %170 = arith.mulf %164, %168 : vector<8x128xf32>
    %171 = arith.addf %169, %170 : vector<8x128xf32>
    %172 = math.tanh %171 : vector<8x128xf32>
    %173 = arith.mulf %166, %172 : vector<8x128xf32>
    %c7_i32 = arith.constant 7 : i32
    %c8_i32_42 = arith.constant 8 : i32
    %174 = arith.muli %c7_i32, %c8_i32_42 : i32
    %175 = tpu.assume_multiple %174, 8 : i32
    %176 = arith.index_cast %175 : i32 to index
    %c0_43 = arith.constant 0 : index
    %177 = vector.load %arg10[%176, %c0_43] : memref<64x512xf32, #tpu.memory_space<vmem>>, vector<8x512xf32>
    %178 = arith.truncf %173 : vector<8x128xf32> to vector<8x128xbf16>
    %cst_44 = arith.constant dense<0.000000e+00> : vector<8x512xf32>
    %179 = tpu.matmul %178, %10, %cst_44 {dimension_numbers = #tpu.dot_dimension_numbers<[1], [0], [0], [1], [0, 0, 1, 1], [], []>} : vector<8x128xbf16>, vector<128x512xbf16>, vector<8x512xf32> -> vector<8x512xf32>
    %180 = arith.addf %177, %179 : vector<8x512xf32>
    %181 = vector.extract_strided_slice %180 {offsets = [0, 0], sizes = [8, 384], strides = [1, 1]} : vector<8x512xf32> to vector<8x384xf32>
    %182 = arith.negf %181 : vector<8x384xf32>
    %183 = math.exp %182 : vector<8x384xf32>
    %cst_45 = arith.constant 1.000000e+00 : f32
    %184 = vector.broadcast %cst_45 : f32 to vector<8x384xf32>
    %185 = arith.addf %184, %183 : vector<8x384xf32>
    %186 = arith.divf %184, %185 : vector<8x384xf32>
    %187 = vector.extract_strided_slice %186 {offsets = [0, 0], sizes = [8, 128], strides = [1, 1]} : vector<8x384xf32> to vector<8x128xf32>
    %188 = vector.extract_strided_slice %186 {offsets = [0, 128], sizes = [8, 128], strides = [1, 1]} : vector<8x384xf32> to vector<8x128xf32>
    %189 = vector.extract_strided_slice %186 {offsets = [0, 256], sizes = [8, 128], strides = [1, 1]} : vector<8x384xf32> to vector<8x128xf32>
    %190 = vector.extract_strided_slice %180 {offsets = [0, 384], sizes = [8, 128], strides = [1, 1]} : vector<8x512xf32> to vector<8x128xf32>
    %191 = math.tanh %190 : vector<8x128xf32>
    %192 = arith.mulf %188, %171 : vector<8x128xf32>
    %193 = arith.mulf %187, %191 : vector<8x128xf32>
    %194 = arith.addf %192, %193 : vector<8x128xf32>
    %195 = math.tanh %194 : vector<8x128xf32>
    %196 = arith.mulf %189, %195 : vector<8x128xf32>
    %c8_i32_46 = arith.constant 8 : i32
    %c0_47 = arith.constant 0 : index
    %c0_48 = arith.constant 0 : index
    %197 = vector.load %arg8[%c0_47, %c0_48] : memref<8x128xf32, #tpu.memory_space<vmem>>, vector<8x128xf32>
    tpu.vector_store %arg8[%c0_47, %c0_48], %196 {strides = array<i32>} : memref<8x128xf32, #tpu.memory_space<vmem>>, vector<8x128xf32>,
    %c0_49 = arith.constant 0 : index
    %c0_50 = arith.constant 0 : index
    %198 = vector.load %arg9[%c0_49, %c0_50] : memref<8x128xf32, #tpu.memory_space<vmem>>, vector<8x128xf32>
    tpu.vector_store %arg9[%c0_49, %c0_50], %194 {strides = array<i32>} : memref<8x128xf32, #tpu.memory_space<vmem>>, vector<8x128xf32>,
    %c0_i32_51 = arith.constant 0 : i32
    %199 = arith.cmpi eq, %arg0, %c0_i32_51 : i32
    %200 = arith.extui %199 : i1 to i32
    %c0_i32_52 = arith.constant 0 : i32
    %201 = arith.cmpi ne, %200, %c0_i32_52 : i32
    scf.if %201 {
      %202 = arith.truncf %196 : vector<8x128xf32> to vector<8x128xbf16>
      %c0_53 = arith.constant 0 : index
      %c0_54 = arith.constant 0 : index
      %203 = vector.load %arg5[%c0_53, %c0_54] : memref<128x128xbf16, #tpu.memory_space<vmem>>, vector<128x128xbf16>
      %cst_55 = arith.constant dense<0.000000e+00> : vector<8x128xf32>
      %204 = tpu.matmul %202, %203, %cst_55 {dimension_numbers = #tpu.dot_dimension_numbers<[1], [0], [0], [1], [0, 0, 1, 1], [], []>} : vector<8x128xbf16>, vector<128x128xbf16>, vector<8x128xf32> -> vector<8x128xf32>
      %c0_56 = arith.constant 0 : index
      %c0_57 = arith.constant 0 : index
      %205 = vector.load %arg6[%c0_56, %c0_57] : memref<1x128xf32, #tpu.memory_space<vmem>>, vector<1x128xf32>
      %206 = vector.broadcast %205 : vector<1x128xf32> to vector<8x128xf32>
      %207 = arith.addf %204, %206 : vector<8x128xf32>
      %c0_58 = arith.constant 0 : index
      %c0_59 = arith.constant 0 : index
      %208 = vector.load %arg7[%c0_58, %c0_59] : memref<8x128xf32, #tpu.memory_space<vmem>>, vector<8x128xf32>
      tpu.vector_store %arg7[%c0_58, %c0_59], %207 {strides = array<i32>} : memref<8x128xf32, #tpu.memory_space<vmem>>, vector<8x128xf32>,
    } else {
    }
    return
  }
  func.func @transform_0(%arg0: i32) -> (i32, i32) {
    %c0_i32 = arith.constant 0 : i32
    %c0_i32_0 = arith.constant 0 : i32
    return %arg0, %c0_i32 : i32, i32
  }
  func.func @transform_1(%arg0: i32) -> (i32, i32) {
    %c0_i32 = arith.constant 0 : i32
    %c0_i32_0 = arith.constant 0 : i32
    %c0_i32_1 = arith.constant 0 : i32
    return %c0_i32, %c0_i32_0 : i32, i32
  }
  func.func @transform_2(%arg0: i32) -> (i32, i32) {
    %c0_i32 = arith.constant 0 : i32
    %c0_i32_0 = arith.constant 0 : i32
    %c0_i32_1 = arith.constant 0 : i32
    return %c0_i32, %c0_i32_0 : i32, i32
  }
  func.func @transform_3(%arg0: i32) -> (i32, i32) {
    %c0_i32 = arith.constant 0 : i32
    %c0_i32_0 = arith.constant 0 : i32
    %c0_i32_1 = arith.constant 0 : i32
    return %c0_i32, %c0_i32_0 : i32, i32
  }
  func.func @transform_4(%arg0: i32) -> (i32, i32) {
    %c0_i32 = arith.constant 0 : i32
    %c0_i32_0 = arith.constant 0 : i32
    %c0_i32_1 = arith.constant 0 : i32
    return %c0_i32, %c0_i32_0 : i32, i32
  }
  func.func @transform_5(%arg0: i32) -> (i32, i32) {
    %c0_i32 = arith.constant 0 : i32
    %c0_i32_0 = arith.constant 0 : i32
    %c0_i32_1 = arith.constant 0 : i32
    return %c0_i32, %c0_i32_0 : i32, i32
  }
  func.func @transform_6(%arg0: i32) -> (i32, i32) {
    %c0_i32 = arith.constant 0 : i32
    %c0_i32_0 = arith.constant 0 : i32
    %c0_i32_1 = arith.constant 0 : i32
    return %c0_i32, %c0_i32_0 : i32, i32
  }
}

</mosaic_0001>

<llo_original>
// kernel: tpu_custom_call.1
$region0: #{tpu_custom_call.1}
  #allocation0 [shape = 'u32[]', space=smem, size = 0x4, offset = 0x4, fixed_abs, tag = 'smem constant byte address 0x4 - core index']
  #allocation1 [shape = 'u32[144,128]{1,0:T(1,128)}', space=vmem, size = 0x12000, scoped, tag = 'internal scratch']
  #allocation2 [shape = 'f32[8,128]{1,0:T(8,128)}', space=vmem, size = 0x1000, scoped, tag = 'scratch operand']
  #allocation3 [shape = 'f32[8,128]{1,0:T(8,128)}', space=vmem, size = 0x1000, scoped, tag = 'scratch operand']
  #allocation4 [shape = 'f32[64,512]{1,0:T(8,128)}', space=vmem, size = 0x20000, scoped, tag = 'scratch operand']
  %s0 = inlined_call_operand.hbm [shape: bf16[64,128], index: 0, kind: input, shape index: {}]
  %s1 = inlined_call_operand.hbm [shape: bf16[128,512], index: 1, kind: input, shape index: {}]
  %s2 = inlined_call_operand.hbm [shape: bf16[128,512], index: 2, kind: input, shape index: {}]
  %s3 = inlined_call_operand.vmem [shape: f32[1,512], index: 3, kind: input, shape index: {}]
  %s4 = inlined_call_operand.hbm [shape: bf16[128,128], index: 4, kind: input, shape index: {}]
  %s5 = inlined_call_operand.vmem [shape: f32[1,128], index: 5, kind: input, shape index: {}]
  %s6 = inlined_call_operand.hbm [shape: f32[8,128], index: 6, kind: output, shape index: {}]
  %s7 = sld [smem:[#allocation0]]
  $region58: #{tpu_custom_call.1} parent=0
    _
  %s9 = ssub.s32 1, %s7
  %s10 = scalar_select 0, %s9, %s7
  $region1: #{tpu_custom_call.1} parent=0
    #allocation5 [shape = 'u8[16384]{0}', space=vmem, size = 0x4000, scoped, tag = 'input window, operand 0, single buffered']
    #allocation6 [shape = 's32[1]{0}', space=sflag, size = 0x4, scoped, tag = 'scoped memory for tpu_custom_call.1']
    #allocation7 [shape = 's32[1]{0}', space=sflag, size = 0x4, scoped, tag = 'scoped memory for tpu_custom_call.1']
    #allocation8 [shape = 'u8[131072]{0}', space=vmem, size = 0x20000, scoped, tag = 'input window, operand 1, single buffered']
    #allocation9 [shape = 's32[1]{0}', space=sflag, size = 0x4, scoped, tag = 'scoped memory for tpu_custom_call.1']
    #allocation10 [shape = 'u8[131072]{0}', space=vmem, size = 0x20000, scoped, tag = 'input window, operand 2, single buffered']
    #allocation11 [shape = 'u8[32768]{0}', space=vmem, size = 0x8000, scoped, tag = 'input window, operand 4, single buffered']
    #allocation12 [shape = 's32[1]{0}', space=sflag, size = 0x4, scoped, tag = 'scoped memory for tpu_custom_call.1']
    #allocation13 [shape = 'u8[4096]{0}', space=vmem, size = 0x1000, scoped, tag = 'output window, operand 0, single buffered']
    %11 = vsyncpa [#allocation6], 0
    %12 = vsyncpa [#allocation9], 0
    %13 = vsyncpa [#allocation12], 0
    %14 = vsyncpa [#allocation7], 0
    // Predicated region
    $region2: #{tpu_custom_call.1} parent=1 // pred_check
      _
    $region3: #{tpu_custom_call.1} parent=1 // pred_check_branch
      %16 = sbr.rel (0) target = $region5
    $region4: #{tpu_custom_call.1} parent=1 // pred_region
      %s18 = ssub.s32 512, 512
      %19 = vsyncadd [#allocation6], %s18
      %s20 = sshll.u32 [#allocation5], 4
      %s21 = int_to_ptr.vmem [resolvable:$true] %s20
      %26 = dma.hbm_to_vmem [thread:$0]  %s0, 512, %s21, [#allocation6], 64, 64, 4
    $region5: #{tpu_custom_call.1} parent=1 // pred_fallthru
      _
    // Predicated region
    $region6: #{tpu_custom_call.1} parent=1 // pred_check
      _
    $region7: #{tpu_custom_call.1} parent=1 // pred_check_branch
      %28 = sbr.rel (0) target = $region9
    $region8: #{tpu_custom_call.1} parent=1 // pred_region
      %s30 = ssub.s32 4096, 4096
      %31 = vsyncadd [#allocation9], %s30
      %s32 = sshll.u32 [#allocation8], 4
      %s33 = int_to_ptr.vmem [resolvable:$true] %s32
      %38 = dma.hbm_to_vmem [thread:$0]  %s1, 4096, %s33, [#allocation9], 256, 256, 16
    $region9: #{tpu_custom_call.1} parent=1 // pred_fallthru
      _
    // Predicated region
    $region10: #{tpu_custom_call.1} parent=1 // pred_check
      _
    $region11: #{tpu_custom_call.1} parent=1 // pred_check_branch
      %40 = sbr.rel (0) target = $region13
    $region12: #{tpu_custom_call.1} parent=1 // pred_region
      %s42 = ssub.s32 4096, 4096
      %43 = vsyncadd [#allocation9], %s42
      %s44 = sshll.u32 [#allocation10], 4
      %s45 = int_to_ptr.vmem [resolvable:$true] %s44
      %50 = dma.hbm_to_vmem [thread:$0]  %s2, 4096, %s45, [#allocation9], 256, 256, 16
    $region13: #{tpu_custom_call.1} parent=1 // pred_fallthru
      _
    // Predicated region
    $region14: #{tpu_custom_call.1} parent=1 // pred_check
      _
    $region15: #{tpu_custom_call.1} parent=1 // pred_check_branch
      %52 = sbr.rel (0) target = $region17
    $region16: #{tpu_custom_call.1} parent=1 // pred_region
      _
    $region17: #{tpu_custom_call.1} parent=1 // pred_fallthru
      _
    // Predicated region
    $region18: #{tpu_custom_call.1} parent=1 // pred_check
      _
    $region19: #{tpu_custom_call.1} parent=1 // pred_check_branch
      %54 = sbr.rel (0) target = $region21
    $region20: #{tpu_custom_call.1} parent=1 // pred_region
      %s56 = ssub.s32 1024, 1024
      %57 = vsyncadd [#allocation12], %s56
      %s58 = sshll.u32 [#allocation11], 4
      %s59 = int_to_ptr.vmem [resolvable:$true] %s58
      %64 = dma.hbm_to_vmem [thread:$0]  %s4, 1024, %s59, [#allocation12], 64, 64, 4
    $region21: #{tpu_custom_call.1} parent=1 // pred_fallthru
      _
    // Predicated region
    $region22: #{tpu_custom_call.1} parent=1 // pred_check
      _
    $region23: #{tpu_custom_call.1} parent=1 // pred_check_branch
      %66 = sbr.rel (0) target = $region25
    $region24: #{tpu_custom_call.1} parent=1 // pred_region
      _
    $region25: #{tpu_custom_call.1} parent=1 // pred_fallthru
      _
    // Predicated region
    $region26: #{tpu_custom_call.1} parent=1 // pred_check
      _
    $region27: #{tpu_custom_call.1} parent=1 // pred_check_branch
      %68 = sbr.rel (0) target = $region29
    $region28: #{tpu_custom_call.1} parent=1 // pred_region
      %69 = dma.done [#allocation6], 512
    $region29: #{tpu_custom_call.1} parent=1 // pred_fallthru
      _
    // Predicated region
    $region30: #{tpu_custom_call.1} parent=1 // pred_check
      _
    $region31: #{tpu_custom_call.1} parent=1 // pred_check_branch
      %71 = sbr.rel (0) target = $region33
    $region32: #{tpu_custom_call.1} parent=1 // pred_region
      %72 = dma.done [#allocation9], 4096
    $region33: #{tpu_custom_call.1} parent=1 // pred_fallthru
      _
    // Predicated region
    $region34: #{tpu_custom_call.1} parent=1 // pred_check
      _
    $region35: #{tpu_custom_call.1} parent=1 // pred_check_branch
      %74 = sbr.rel (0) target = $region37
    $region36: #{tpu_custom_call.1} parent=1 // pred_region
      %75 = dma.done [#allocation9], 4096
    $region37: #{tpu_custom_call.1} parent=1 // pred_fallthru
      _
    // Predicated region
    $region38: #{tpu_custom_call.1} parent=1 // pred_check
      _
    $region39: #{tpu_custom_call.1} parent=1 // pred_check_branch
      %77 = sbr.rel (0) target = $region41
    $region40: #{tpu_custom_call.1} parent=1 // pred_region
      %78 = dma.done [#allocation12], 1024
    $region41: #{tpu_custom_call.1} parent=1 // pred_fallthru
      _
    %p80 = scmp.eq.s32.totalorder 0, 0
    // Predicated region
    $region42: #{tpu_custom_call.1} parent=1 // pred_check
      %p81 = pneg %p80
    $region43: #{tpu_custom_call.1} parent=1 // pred_check_branch
      %83 = sbr.rel (%p81) target = $region45
    $region44: #{tpu_custom_call.1} parent=1 // pred_region
      %84 = vst [vmem:[#allocation2] sm:$0xff] 0.0
      %85 = vst [vmem:[#allocation3] sm:$0xff] 0.0
      %86 = vst [vmem:[#allocation13] sm:$0xff] 0.0
    $region45: #{tpu_custom_call.1} parent=1 // pred_fallthru
      _
    %v87 = vld [vmem:[#allocation5] sm:$0xf]
    %v88 = vld [vmem:[#allocation5 + $0x4] sm:$0xf]
    %v89 = vld [vmem:[#allocation5 + $0x8] sm:$0xf]
    %v90 = vld [vmem:[#allocation5 + $0xc] sm:$0xf]
    %v91 = vld [vmem:[#allocation5 + $0x10] sm:$0xf]
    %v92 = vld [vmem:[#allocation5 + $0x14] sm:$0xf]
    %v93 = vld [vmem:[#allocation5 + $0x18] sm:$0xf]
    %v94 = vld [vmem:[#allocation5 + $0x1c] sm:$0xf]
    %v95 = vld [vmem:[#allocation8] sm:$0xff]
    %v96 = vld [vmem:[#allocation8 + $0x8] sm:$0xff]
    %v97 = vld [vmem:[#allocation8 + $0x10] sm:$0xff]
    %v98 = vld [vmem:[#allocation8 + $0x18] sm:$0xff]
    %v99 = vld [vmem:[#allocation8 + $0x20] sm:$0xff]
    %v100 = vld [vmem:[#allocation8 + $0x28] sm:$0xff]
    %v101 = vld [vmem:[#allocation8 + $0x30] sm:$0xff]
    %v102 = vld [vmem:[#allocation8 + $0x38] sm:$0xff]
    %v103 = vld [vmem:[#allocation8 + $0x40] sm:$0xff]
    %v104 = vld [vmem:[#allocation8 + $0x48] sm:$0xff]
    %v105 = vld [vmem:[#allocation8 + $0x50] sm:$0xff]
    %v106 = vld [vmem:[#allocation8 + $0x58] sm:$0xff]
    %v107 = vld [vmem:[#allocation8 + $0x60] sm:$0xff]
    %v108 = vld [vmem:[#allocation8 + $0x68] sm:$0xff]
    %v109 = vld [vmem:[#allocation8 + $0x70] sm:$0xff]
    %v110 = vld [vmem:[#allocation8 + $0x78] sm:$0xff]
    %v111 = vld [vmem:[#allocation8 + $0x80] sm:$0xff]
    %v112 = vld [vmem:[#allocation8 + $0x88] sm:$0xff]
    %v113 = vld [vmem:[#allocation8 + $0x90] sm:$0xff]
    %v114 = vld [vmem:[#allocation8 + $0x98] sm:$0xff]
    %v115 = vld [vmem:[#allocation8 + $0xa0] sm:$0xff]
    %v116 = vld [vmem:[#allocation8 + $0xa8] sm:$0xff]
    %v117 = vld [vmem:[#allocation8 + $0xb0] sm:$0xff]
    %v118 = vld [vmem:[#allocation8 + $0xb8] sm:$0xff]
    %v119 = vld [vmem:[#allocation8 + $0xc0] sm:$0xff]
    %v120 = vld [vmem:[#allocation8 + $0xc8] sm:$0xff]
    %v121 = vld [vmem:[#allocation8 + $0xd0] sm:$0xff]
    %v122 = vld [vmem:[#allocation8 + $0xd8] sm:$0xff]
    %v123 = vld [vmem:[#allocation8 + $0xe0] sm:$0xff]
    %v124 = vld [vmem:[#allocation8 + $0xe8] sm:$0xff]
    %v125 = vld [vmem:[#allocation8 + $0xf0] sm:$0xff]
    %v126 = vld [vmem:[#allocation8 + $0xf8] sm:$0xff]
    %v127 = vld [vmem:[%s3] sm:$0xf]
    %v129 = vlaneseq
    %v130 = vshrl.u32 %v129, 7
    %v131 = vsub.s32 0, %v130
    %v132 = vrot.slane %v127, %v131
    %v133 = vlaneseq
    %v134 = vshrl.u32 %v133, 7
    %v135 = vsub.s32 1, %v134
    %v136 = vrot.slane %v127, %v135
    %v137 = vlaneseq
    %v138 = vshrl.u32 %v137, 7
    %v139 = vsub.s32 2, %v138
    %v140 = vrot.slane %v127, %v139
    %v141 = vlaneseq
    %v142 = vshrl.u32 %v141, 7
    %v143 = vsub.s32 3, %v142
    %v144 = vrot.slane %v127, %v143
    %v157 = vunpack.c.l.b16 %v87
    %v158 = vunpack.c.l.b16 %v88
    %v159 = vunpack.c.l.b16 %v89
    %v160 = vunpack.c.l.b16 %v90
    %v161 = vunpack.c.l.b16 %v91
    %v162 = vunpack.c.l.b16 %v92
    %v163 = vunpack.c.l.b16 %v93
    %v164 = vunpack.c.l.b16 %v94
    %v165 = vpack.c.b16 %v158, %v157
    %v166 = vpack.c.b16 %v160, %v159
    %v167 = vpack.c.b16 %v162, %v161
    %v168 = vpack.c.b16 %v164, %v163
    %v205 = vunpack.c.l.b16 %v95
    %v206 = vunpack.c.h.b16 %v95
    %v207 = vunpack.c.l.b16 %v96
    %v208 = vunpack.c.h.b16 %v96
    %v209 = vunpack.c.l.b16 %v97
    %v210 = vunpack.c.h.b16 %v97
    %v211 = vunpack.c.l.b16 %v98
    %v212 = vunpack.c.h.b16 %v98
    %v213 = vunpack.c.l.b16 %v99
    %v214 = vunpack.c.h.b16 %v99
    %v215 = vunpack.c.l.b16 %v100
    %v216 = vunpack.c.h.b16 %v100
    %v217 = vunpack.c.l.b16 %v101
    %v218 = vunpack.c.h.b16 %v101
    %v219 = vunpack.c.l.b16 %v102
    %v220 = vunpack.c.h.b16 %v102
    %v221 = vunpack.c.l.b16 %v103
    %v222 = vunpack.c.h.b16 %v103
    %v223 = vunpack.c.l.b16 %v104
    %v224 = vunpack.c.h.b16 %v104
    %v225 = vunpack.c.l.b16 %v105
    %v226 = vunpack.c.h.b16 %v105
    %v227 = vunpack.c.l.b16 %v106
    %v228 = vunpack.c.h.b16 %v106
    %v229 = vunpack.c.l.b16 %v107
    %v230 = vunpack.c.h.b16 %v107
    %v231 = vunpack.c.l.b16 %v108
    %v232 = vunpack.c.h.b16 %v108
    %v233 = vunpack.c.l.b16 %v109
    %v234 = vunpack.c.h.b16 %v109
    %v235 = vunpack.c.l.b16 %v110
    %v236 = vunpack.c.h.b16 %v110
    %v237 = vunpack.c.l.b16 %v111
    %v238 = vunpack.c.h.b16 %v111
    %v239 = vunpack.c.l.b16 %v112
    %v240 = vunpack.c.h.b16 %v112
    %v241 = vunpack.c.l.b16 %v113
    %v242 = vunpack.c.h.b16 %v113
    %v243 = vunpack.c.l.b16 %v114
    %v244 = vunpack.c.h.b16 %v114
    %v245 = vunpack.c.l.b16 %v115
    %v246 = vunpack.c.h.b16 %v115
    %v247 = vunpack.c.l.b16 %v116
    %v248 = vunpack.c.h.b16 %v116
    %v249 = vunpack.c.l.b16 %v117
    %v250 = vunpack.c.h.b16 %v117
    %v251 = vunpack.c.l.b16 %v118
    %v252 = vunpack.c.h.b16 %v118
    %v253 = vunpack.c.l.b16 %v119
    %v254 = vunpack.c.h.b16 %v119
    %v255 = vunpack.c.l.b16 %v120
    %v256 = vunpack.c.h.b16 %v120
    %v257 = vunpack.c.l.b16 %v121
    %v258 = vunpack.c.h.b16 %v121
    %v259 = vunpack.c.l.b16 %v122
    %v260 = vunpack.c.h.b16 %v122
    %v261 = vunpack.c.l.b16 %v123
    %v262 = vunpack.c.h.b16 %v123
    %v263 = vunpack.c.l.b16 %v124
    %v264 = vunpack.c.h.b16 %v124
    %v265 = vunpack.c.l.b16 %v125
    %v266 = vunpack.c.h.b16 %v125
    %v267 = vunpack.c.l.b16 %v126
    %v268 = vunpack.c.h.b16 %v126
    %v269 = vpack.c.b16 %v209, %v205
    %v270 = vpack.c.b16 %v210, %v206
    %v271 = vpack.c.b16 %v211, %v207
    %v272 = vpack.c.b16 %v212, %v208
    %v273 = vpack.c.b16 %v217, %v213
    %v274 = vpack.c.b16 %v218, %v214
    %v275 = vpack.c.b16 %v219, %v215
    %v276 = vpack.c.b16 %v220, %v216
    %v277 = vpack.c.b16 %v225, %v221
    %v278 = vpack.c.b16 %v226, %v222
    %v279 = vpack.c.b16 %v227, %v223
    %v280 = vpack.c.b16 %v228, %v224
    %v281 = vpack.c.b16 %v233, %v229
    %v282 = vpack.c.b16 %v234, %v230
    %v283 = vpack.c.b16 %v235, %v231
    %v284 = vpack.c.b16 %v236, %v232
    %v285 = vpack.c.b16 %v241, %v237
    %v286 = vpack.c.b16 %v242, %v238
    %v287 = vpack.c.b16 %v243, %v239
    %v288 = vpack.c.b16 %v244, %v240
    %v289 = vpack.c.b16 %v249, %v245
    %v290 = vpack.c.b16 %v250, %v246
    %v291 = vpack.c.b16 %v251, %v247
    %v292 = vpack.c.b16 %v252, %v248
    %v293 = vpack.c.b16 %v257, %v253
    %v294 = vpack.c.b16 %v258, %v254
    %v295 = vpack.c.b16 %v259, %v255
    %v296 = vpack.c.b16 %v260, %v256
    %v297 = vpack.c.b16 %v265, %v261
    %v298 = vpack.c.b16 %v266, %v262
    %v299 = vpack.c.b16 %v267, %v263
    %v300 = vpack.c.b16 %v268, %v264
    %333 = vmatprep.subr.bf16.mxu0 %v270
    %334 = vmatpush1.bf16.msra.mxu0 %v269
    %335 = vmatprep.subr.bf16.mxu0 %v274
    %336 = vmatpush1.bf16.msra.mxu0 %v273
    %337 = vmatprep.subr.bf16.mxu0 %v278
    %338 = vmatpush1.bf16.msra.mxu0 %v277
    %339 = vmatprep.subr.bf16.mxu0 %v282
    %340 = vmatpush1.bf16.msra.mxu0 %v281
    %341 = vmatprep.subr.bf16.mxu0 %v286
    %342 = vmatpush1.bf16.msra.mxu0 %v285
    %343 = vmatprep.subr.bf16.mxu0 %v290
    %344 = vmatpush1.bf16.msra.mxu0 %v289
    %345 = vmatprep.subr.bf16.mxu0 %v294
    %346 = vmatpush1.bf16.msra.mxu0 %v293
    %347 = vmatprep.subr.bf16.mxu0 %v298
    %348 = vmatpush1.bf16.msra.mxu0 %v297
    %349 = vmatprep.subr.bf16.mxu0 0
    %350 = vmatpush1.bf16.msra.mxu0 0
    %351 = vmatprep.subr.bf16.mxu0 0
    %352 = vmatpush1.bf16.msra.mxu0 0
    %353 = vmatprep.subr.bf16.mxu0 0
    %354 = vmatpush1.bf16.msra.mxu0 0
    %355 = vmatprep.subr.bf16.mxu0 0
    %356 = vmatpush1.bf16.msra.mxu0 0
    %357 = vmatprep.subr.bf16.mxu0 0
    %358 = vmatpush1.bf16.msra.mxu0 0
    %359 = vmatprep.subr.bf16.mxu0 0
    %360 = vmatpush1.bf16.msra.mxu0 0
    %361 = vmatprep.subr.bf16.mxu0 0
    %362 = vmatpush1.bf16.msra.mxu0 0
    %363 = vmatprep.subr.bf16.mxu0 0
    %364 = vmatpush1.bf16.msra.mxu0 0
    %365 = vmatprep.mubr.bf16.mxu0 0
    %366 = vmatmul.mubr.bf16.gmra.mrb[0].mxu0 %v165
    %v367 = vpop.f32.mrb[0].mxu0
    %v368 = vadd.f32 %v132, %v367
    %v369 = vpop.f32.mrb[0].mxu0
    %v370 = vadd.f32 %v136, %v369
    %v371 = vpop.f32.mrb[0].mxu0
    %v372 = vadd.f32 %v132, %v371
    %v373 = vpop.f32.mrb[0].mxu0
    %v374 = vadd.f32 %v136, %v373
    %375 = vmatprep.mubr.bf16.mxu0 0
    %376 = vmatmul.mubr.bf16.gmra.mrb[0].mxu0 %v166
    %v377 = vpop.f32.mrb[0].mxu0
    %v378 = vadd.f32 %v132, %v377
    %v379 = vpop.f32.mrb[0].mxu0
    %v380 = vadd.f32 %v136, %v379
    %v381 = vpop.f32.mrb[0].mxu0
    %v382 = vadd.f32 %v132, %v381
    %v383 = vpop.f32.mrb[0].mxu0
    %v384 = vadd.f32 %v136, %v383
    %385 = vmatprep.mubr.bf16.mxu0 0
    %386 = vmatmul.mubr.bf16.gmra.mrb[0].mxu0 %v167
    %v387 = vpop.f32.mrb[0].mxu0
    %v388 = vadd.f32 %v132, %v387
    %v389 = vpop.f32.mrb[0].mxu0
    %v390 = vadd.f32 %v136, %v389
    %v391 = vpop.f32.mrb[0].mxu0
    %v392 = vadd.f32 %v132, %v391
    %v393 = vpop.f32.mrb[0].mxu0
    %v394 = vadd.f32 %v136, %v393
    %395 = vmatprep.mubr.bf16.mxu0 0
    %396 = vmatmul.mubr.bf16.gmra.mrb[0].mxu0 %v168
    %v397 = vpop.f32.mrb[0].mxu0
    %v398 = vadd.f32 %v132, %v397
    %v399 = vpop.f32.mrb[0].mxu0
    %v400 = vadd.f32 %v136, %v399
    %v401 = vpop.f32.mrb[0].mxu0
    %v402 = vadd.f32 %v132, %v401
    %v403 = vpop.f32.mrb[0].mxu0
    %v404 = vadd.f32 %v136, %v403
    %405 = vdwg.mxu0
    %406 = vmatprep.subr.bf16.mxu0 %v272
    %407 = vmatpush1.bf16.msra.mxu0 %v271
    %408 = vmatprep.subr.bf16.mxu0 %v276
    %409 = vmatpush1.bf16.msra.mxu0 %v275
    %410 = vmatprep.subr.bf16.mxu0 %v280
    %411 = vmatpush1.bf16.msra.mxu0 %v279
    %412 = vmatprep.subr.bf16.mxu0 %v284
    %413 = vmatpush1.bf16.msra.mxu0 %v283
    %414 = vmatprep.subr.bf16.mxu0 %v288
    %415 = vmatpush1.bf16.msra.mxu0 %v287
    %416 = vmatprep.subr.bf16.mxu0 %v292
    %417 = vmatpush1.bf16.msra.mxu0 %v291
    %418 = vmatprep.subr.bf16.mxu0 %v296
    %419 = vmatpush1.bf16.msra.mxu0 %v295
    %420 = vmatprep.subr.bf16.mxu0 %v300
    %421 = vmatpush1.bf16.msra.mxu0 %v299
    %422 = vmatprep.subr.bf16.mxu0 0
    %423 = vmatpush1.bf16.msra.mxu0 0
    %424 = vmatprep.subr.bf16.mxu0 0
    %425 = vmatpush1.bf16.msra.mxu0 0
    %426 = vmatprep.subr.bf16.mxu0 0
    %427 = vmatpush1.bf16.msra.mxu0 0
    %428 = vmatprep.subr.bf16.mxu0 0
    %429 = vmatpush1.bf16.msra.mxu0 0
    %430 = vmatprep.subr.bf16.mxu0 0
    %431 = vmatpush1.bf16.msra.mxu0 0
    %432 = vmatprep.subr.bf16.mxu0 0
    %433 = vmatpush1.bf16.msra.mxu0 0
    %434 = vmatprep.subr.bf16.mxu0 0
    %435 = vmatpush1.bf16.msra.mxu0 0
    %436 = vmatprep.subr.bf16.mxu0 0
    %437 = vmatpush1.bf16.msra.mxu0 0
    %438 = vmatprep.mubr.bf16.mxu0 0
    %439 = vmatmul.mubr.bf16.gmra.mrb[0].mxu0 %v165
    %v440 = vpop.f32.mrb[0].mxu0
    %v441 = vadd.f32 %v140, %v440
    %v442 = vpop.f32.mrb[0].mxu0
    %v443 = vadd.f32 %v144, %v442
    %v444 = vpop.f32.mrb[0].mxu0
    %v445 = vadd.f32 %v140, %v444
    %v446 = vpop.f32.mrb[0].mxu0
    %v447 = vadd.f32 %v144, %v446
    %448 = vmatprep.mubr.bf16.mxu0 0
    %449 = vmatmul.mubr.bf16.gmra.mrb[0].mxu0 %v166
    %v450 = vpop.f32.mrb[0].mxu0
    %v451 = vadd.f32 %v140, %v450
    %v452 = vpop.f32.mrb[0].mxu0
    %v453 = vadd.f32 %v144, %v452
    %v454 = vpop.f32.mrb[0].mxu0
    %v455 = vadd.f32 %v140, %v454
    %v456 = vpop.f32.mrb[0].mxu0
    %v457 = vadd.f32 %v144, %v456
    %458 = vmatprep.mubr.bf16.mxu0 0
    %459 = vmatmul.mubr.bf16.gmra.mrb[0].mxu0 %v167
    %v460 = vpop.f32.mrb[0].mxu0
    %v461 = vadd.f32 %v140, %v460
    %v462 = vpop.f32.mrb[0].mxu0
    %v463 = vadd.f32 %v144, %v462
    %v464 = vpop.f32.mrb[0].mxu0
    %v465 = vadd.f32 %v140, %v464
    %v466 = vpop.f32.mrb[0].mxu0
    %v467 = vadd.f32 %v144, %v466
    %468 = vmatprep.mubr.bf16.mxu0 0
    %469 = vmatmul.mubr.bf16.gmra.mrb[0].mxu0 %v168
    %v470 = vpop.f32.mrb[0].mxu0
    %v471 = vadd.f32 %v140, %v470
    %v472 = vpop.f32.mrb[0].mxu0
    %v473 = vadd.f32 %v144, %v472
    %v474 = vpop.f32.mrb[0].mxu0
    %v475 = vadd.f32 %v140, %v474
    %v476 = vpop.f32.mrb[0].mxu0
    %v477 = vadd.f32 %v144, %v476
    %478 = vdwg.mxu0
    %479 = vst [vmem:[#allocation4] sm:$0xff] %v368
    %480 = vst [vmem:[#allocation4 + $0x8] sm:$0xff] %v370
    %481 = vst [vmem:[#allocation4 + $0x10] sm:$0xff] %v441
    %482 = vst [vmem:[#allocation4 + $0x18] sm:$0xff] %v443
    %483 = vst [vmem:[#allocation4 + $0x20] sm:$0xff] %v372
    %484 = vst [vmem:[#allocation4 + $0x28] sm:$0xff] %v374
    %485 = vst [vmem:[#allocation4 + $0x30] sm:$0xff] %v445
    %486 = vst [vmem:[#allocation4 + $0x38] sm:$0xff] %v447
    %487 = vst [vmem:[#allocation4 + $0x40] sm:$0xff] %v378
    %488 = vst [vmem:[#allocation4 + $0x48] sm:$0xff] %v380
    %489 = vst [vmem:[#allocation4 + $0x50] sm:$0xff] %v451
    %490 = vst [vmem:[#allocation4 + $0x58] sm:$0xff] %v453
    %491 = vst [vmem:[#allocation4 + $0x60] sm:$0xff] %v382
    %492 = vst [vmem:[#allocation4 + $0x68] sm:$0xff] %v384
    %493 = vst [vmem:[#allocation4 + $0x70] sm:$0xff] %v455
    %494 = vst [vmem:[#allocation4 + $0x78] sm:$0xff] %v457
    %495 = vst [vmem:[#allocation4 + $0x80] sm:$0xff] %v388
    %496 = vst [vmem:[#allocation4 + $0x88] sm:$0xff] %v390
    %497 = vst [vmem:[#allocation4 + $0x90] sm:$0xff] %v461
    %498 = vst [vmem:[#allocation4 + $0x98] sm:$0xff] %v463
    %499 = vst [vmem:[#allocation4 + $0xa0] sm:$0xff] %v392
    %500 = vst [vmem:[#allocation4 + $0xa8] sm:$0xff] %v394
    %501 = vst [vmem:[#allocation4 + $0xb0] sm:$0xff] %v465
    %502 = vst [vmem:[#allocation4 + $0xb8] sm:$0xff] %v467
    %503 = vst [vmem:[#allocation4 + $0xc0] sm:$0xff] %v398
    %504 = vst [vmem:[#allocation4 + $0xc8] sm:$0xff] %v400
    %505 = vst [vmem:[#allocation4 + $0xd0] sm:$0xff] %v471
    %506 = vst [vmem:[#allocation4 + $0xd8] sm:$0xff] %v473
    %507 = vst [vmem:[#allocation4 + $0xe0] sm:$0xff] %v402
    %508 = vst [vmem:[#allocation4 + $0xe8] sm:$0xff] %v404
    %509 = vst [vmem:[#allocation4 + $0xf0] sm:$0xff] %v475
    %510 = vst [vmem:[#allocation4 + $0xf8] sm:$0xff] %v477
    %v511 = vld [vmem:[#allocation10] sm:$0xff]
    %v512 = vld [vmem:[#allocation10 + $0x8] sm:$0xff]
    %v513 = vld [vmem:[#allocation10 + $0x10] sm:$0xff]
    %v514 = vld [vmem:[#allocation10 + $0x18] sm:$0xff]
    %v515 = vld [vmem:[#allocation10 + $0x20] sm:$0xff]
    %v516 = vld [vmem:[#allocation10 + $0x28] sm:$0xff]
    %v517 = vld [vmem:[#allocation10 + $0x30] sm:$0xff]
    %v518 = vld [vmem:[#allocation10 + $0x38] sm:$0xff]
    %v519 = vld [vmem:[#allocation10 + $0x40] sm:$0xff]
    %v520 = vld [vmem:[#allocation10 + $0x48] sm:$0xff]
    %v521 = vld [vmem:[#allocation10 + $0x50] sm:$0xff]
    %v522 = vld [vmem:[#allocation10 + $0x58] sm:$0xff]
    %v523 = vld [vmem:[#allocation10 + $0x60] sm:$0xff]
    %v524 = vld [vmem:[#allocation10 + $0x68] sm:$0xff]
    %v525 = vld [vmem:[#allocation10 + $0x70] sm:$0xff]
    %v526 = vld [vmem:[#allocation10 + $0x78] sm:$0xff]
    %v527 = vld [vmem:[#allocation10 + $0x80] sm:$0xff]
    %v528 = vld [vmem:[#allocation10 + $0x88] sm:$0xff]
    %v529 = vld [vmem:[#allocation10 + $0x90] sm:$0xff]
    %v530 = vld [vmem:[#allocation10 + $0x98] sm:$0xff]
    %v531 = vld [vmem:[#allocation10 + $0xa0] sm:$0xff]
    %v532 = vld [vmem:[#allocation10 + $0xa8] sm:$0xff]
    %v533 = vld [vmem:[#allocation10 + $0xb0] sm:$0xff]
    %v534 = vld [vmem:[#allocation10 + $0xb8] sm:$0xff]
    %v535 = vld [vmem:[#allocation10 + $0xc0] sm:$0xff]
    %v536 = vld [vmem:[#allocation10 + $0xc8] sm:$0xff]
    %v537 = vld [vmem:[#allocation10 + $0xd0] sm:$0xff]
    %v538 = vld [vmem:[#allocation10 + $0xd8] sm:$0xff]
    %v539 = vld [vmem:[#allocation10 + $0xe0] sm:$0xff]
    %v540 = vld [vmem:[#allocation10 + $0xe8] sm:$0xff]
    %v541 = vld [vmem:[#allocation10 + $0xf0] sm:$0xff]
    %v542 = vld [vmem:[#allocation10 + $0xf8] sm:$0xff]
    %v543 = vld [vmem:[#allocation2] sm:$0xff]
    %v544 = vld [vmem:[#allocation3] sm:$0xff]
    %s545 = smul.u32 0, 4
    %s546 = smul.addr %s545, 8
    %s547 = scalar_lea.vmem [#allocation4], %s546
    %v548 = vld [vmem:[%s547] sm:$0xff]
    %v549 = vld [vmem:[%s547 + $0x8] sm:$0xff]
    %v550 = vld [vmem:[%s547 + $0x10] sm:$0xff]
    %v551 = vld [vmem:[%s547 + $0x18] sm:$0xff]
    %v552 = vpack.c.bf16 %v543, %v543
    %v585 = vunpack.c.l.b16 %v511
    %v586 = vunpack.c.h.b16 %v511
    %v587 = vunpack.c.l.b16 %v512
    %v588 = vunpack.c.h.b16 %v512
    %v589 = vunpack.c.l.b16 %v513
    %v590 = vunpack.c.h.b16 %v513
    %v591 = vunpack.c.l.b16 %v514
    %v592 = vunpack.c.h.b16 %v514
    %v593 = vunpack.c.l.b16 %v515
    %v594 = vunpack.c.h.b16 %v515
    %v595 = vunpack.c.l.b16 %v516
    %v596 = vunpack.c.h.b16 %v516
    %v597 = vunpack.c.l.b16 %v517
    %v598 = vunpack.c.h.b16 %v517
    %v599 = vunpack.c.l.b16 %v518
    %v600 = vunpack.c.h.b16 %v518
    %v601 = vunpack.c.l.b16 %v519
    %v602 = vunpack.c.h.b16 %v519
    %v603 = vunpack.c.l.b16 %v520
    %v604 = vunpack.c.h.b16 %v520
    %v605 = vunpack.c.l.b16 %v521
    %v606 = vunpack.c.h.b16 %v521
    %v607 = vunpack.c.l.b16 %v522
    %v608 = vunpack.c.h.b16 %v522
    %v609 = vunpack.c.l.b16 %v523
    %v610 = vunpack.c.h.b16 %v523
    %v611 = vunpack.c.l.b16 %v524
    %v612 = vunpack.c.h.b16 %v524
    %v613 = vunpack.c.l.b16 %v525
    %v614 = vunpack.c.h.b16 %v525
    %v615 = vunpack.c.l.b16 %v526
    %v616 = vunpack.c.h.b16 %v526
    %v617 = vunpack.c.l.b16 %v527
    %v618 = vunpack.c.h.b16 %v527
    %v619 = vunpack.c.l.b16 %v528
    %v620 = vunpack.c.h.b16 %v528
    %v621 = vunpack.c.l.b16 %v529
    %v622 = vunpack.c.h.b16 %v529
    %v623 = vunpack.c.l.b16 %v530
    %v624 = vunpack.c.h.b16 %v530
    %v625 = vunpack.c.l.b16 %v531
    %v626 = vunpack.c.h.b16 %v531
    %v627 = vunpack.c.l.b16 %v532
    %v628 = vunpack.c.h.b16 %v532
    %v629 = vunpack.c.l.b16 %v533
    %v630 = vunpack.c.h.b16 %v533
    %v631 = vunpack.c.l.b16 %v534
    %v632 = vunpack.c.h.b16 %v534
    %v633 = vunpack.c.l.b16 %v535
    %v634 = vunpack.c.h.b16 %v535
    %v635 = vunpack.c.l.b16 %v536
    %v636 = vunpack.c.h.b16 %v536
    %v637 = vunpack.c.l.b16 %v537
    %v638 = vunpack.c.h.b16 %v537
    %v639 = vunpack.c.l.b16 %v538
    %v640 = vunpack.c.h.b16 %v538
    %v641 = vunpack.c.l.b16 %v539
    %v642 = vunpack.c.h.b16 %v539
    %v643 = vunpack.c.l.b16 %v540
    %v644 = vunpack.c.h.b16 %v540
    %v645 = vunpack.c.l.b16 %v541
    %v646 = vunpack.c.h.b16 %v541
    %v647 = vunpack.c.l.b16 %v542
    %v648 = vunpack.c.h.b16 %v542
    %v649 = vpack.c.b16 %v589, %v585
    %v650 = vpack.c.b16 %v590, %v586
    %v651 = vpack.c.b16 %v591, %v587
    %v652 = vpack.c.b16 %v592, %v588
    %v653 = vpack.c.b16 %v597, %v593
    %v654 = vpack.c.b16 %v598, %v594
    %v655 = vpack.c.b16 %v599, %v595
    %v656 = vpack.c.b16 %v600, %v596
    %v657 = vpack.c.b16 %v605, %v601
    %v658 = vpack.c.b16 %v606, %v602
    %v659 = vpack.c.b16 %v607, %v603
    %v660 = vpack.c.b16 %v608, %v604
    %v661 = vpack.c.b16 %v613, %v609
    %v662 = vpack.c.b16 %v614, %v610
    %v663 = vpack.c.b16 %v615, %v611
    %v664 = vpack.c.b16 %v616, %v612
    %v665 = vpack.c.b16 %v621, %v617
    %v666 = vpack.c.b16 %v622, %v618
    %v667 = vpack.c.b16 %v623, %v619
    %v668 = vpack.c.b16 %v624, %v620
    %v669 = vpack.c.b16 %v629, %v625
    %v670 = vpack.c.b16 %v630, %v626
    %v671 = vpack.c.b16 %v631, %v627
    %v672 = vpack.c.b16 %v632, %v628
    %v673 = vpack.c.b16 %v637, %v633
    %v674 = vpack.c.b16 %v638, %v634
    %v675 = vpack.c.b16 %v639, %v635
    %v676 = vpack.c.b16 %v640, %v636
    %v677 = vpack.c.b16 %v645, %v641
    %v678 = vpack.c.b16 %v646, %v642
    %v679 = vpack.c.b16 %v647, %v643
    %v680 = vpack.c.b16 %v648, %v644
    %713 = vmatprep.subr.bf16.mxu0 %v650
    %714 = vmatpush1.bf16.msra.mxu0 %v649
    %715 = vmatprep.subr.bf16.mxu0 %v654
    %716 = vmatpush1.bf16.msra.mxu0 %v653
    %717 = vmatprep.subr.bf16.mxu0 %v658
    %718 = vmatpush1.bf16.msra.mxu0 %v657
    %719 = vmatprep.subr.bf16.mxu0 %v662
    %720 = vmatpush1.bf16.msra.mxu0 %v661
    %721 = vmatprep.subr.bf16.mxu0 %v666
    %722 = vmatpush1.bf16.msra.mxu0 %v665
    %723 = vmatprep.subr.bf16.mxu0 %v670
    %724 = vmatpush1.bf16.msra.mxu0 %v669
    %725 = vmatprep.subr.bf16.mxu0 %v674
    %726 = vmatpush1.bf16.msra.mxu0 %v673
    %727 = vmatprep.subr.bf16.mxu0 %v678
    %728 = vmatpush1.bf16.msra.mxu0 %v677
    %729 = vmatprep.subr.bf16.mxu0 0
    %730 = vmatpush1.bf16.msra.mxu0 0
    %731 = vmatprep.subr.bf16.mxu0 0
    %732 = vmatpush1.bf16.msra.mxu0 0
    %733 = vmatprep.subr.bf16.mxu0 0
    %734 = vmatpush1.bf16.msra.mxu0 0
    %735 = vmatprep.subr.bf16.mxu0 0
    %736 = vmatpush1.bf16.msra.mxu0 0
    %737 = vmatprep.subr.bf16.mxu0 0
    %738 = vmatpush1.bf16.msra.mxu0 0
    %739 = vmatprep.subr.bf16.mxu0 0
    %740 = vmatpush1.bf16.msra.mxu0 0
    %741 = vmatprep.subr.bf16.mxu0 0
    %742 = vmatpush1.bf16.msra.mxu0 0
    %743 = vmatprep.subr.bf16.mxu0 0
    %744 = vmatpush1.bf16.msra.mxu0 0
    %745 = vmatprep.mubr.bf16.mxu0 0
    %746 = vmatmul.mubr.bf16.gmra.mrb[0].mxu0 %v552
    %v747 = vpop.f32.mrb[0].mxu0
    %v748 = vadd.f32 0.0, %v747
    %v749 = vpop.f32.mrb[0].mxu0
    %v750 = vadd.f32 0.0, %v749
    %v751 = vpop.f32.mrb[0].mxu0
    %v752 = vpop.f32.mrb[0].mxu0
    %753 = vdwg.mxu0
    %754 = vmatprep.subr.bf16.mxu0 %v652
    %755 = vmatpush1.bf16.msra.mxu0 %v651
    %756 = vmatprep.subr.bf16.mxu0 %v656
    %757 = vmatpush1.bf16.msra.mxu0 %v655
    %758 = vmatprep.subr.bf16.mxu0 %v660
    %759 = vmatpush1.bf16.msra.mxu0 %v659
    %760 = vmatprep.subr.bf16.mxu0 %v664
    %761 = vmatpush1.bf16.msra.mxu0 %v663
    %762 = vmatprep.subr.bf16.mxu0 %v668
    %763 = vmatpush1.bf16.msra.mxu0 %v667
    %764 = vmatprep.subr.bf16.mxu0 %v672
    %765 = vmatpush1.bf16.msra.mxu0 %v671
    %766 = vmatprep.subr.bf16.mxu0 %v676
    %767 = vmatpush1.bf16.msra.mxu0 %v675
    %768 = vmatprep.subr.bf16.mxu0 %v680
    %769 = vmatpush1.bf16.msra.mxu0 %v679
    %770 = vmatprep.subr.bf16.mxu0 0
    %771 = vmatpush1.bf16.msra.mxu0 0
    %772 = vmatprep.subr.bf16.mxu0 0
    %773 = vmatpush1.bf16.msra.mxu0 0
    %774 = vmatprep.subr.bf16.mxu0 0
    %775 = vmatpush1.bf16.msra.mxu0 0
    %776 = vmatprep.subr.bf16.mxu0 0
    %777 = vmatpush1.bf16.msra.mxu0 0
    %778 = vmatprep.subr.bf16.mxu0 0
    %779 = vmatpush1.bf16.msra.mxu0 0
    %780 = vmatprep.subr.bf16.mxu0 0
    %781 = vmatpush1.bf16.msra.mxu0 0
    %782 = vmatprep.subr.bf16.mxu0 0
    %783 = vmatpush1.bf16.msra.mxu0 0
    %784 = vmatprep.subr.bf16.mxu0 0
    %785 = vmatpush1.bf16.msra.mxu0 0
    %786 = vmatprep.mubr.bf16.mxu0 0
    %787 = vmatmul.mubr.bf16.gmra.mrb[0].mxu0 %v552
    %v788 = vpop.f32.mrb[0].mxu0
    %v789 = vadd.f32 0.0, %v788
    %v790 = vpop.f32.mrb[0].mxu0
    %v791 = vadd.f32 0.0, %v790
    %v792 = vpop.f32.mrb[0].mxu0
    %v793 = vpop.f32.mrb[0].mxu0
    %794 = vdwg.mxu0
    %v795 = vadd.f32 %v548, %v748
    %v796 = vadd.f32 %v549, %v750
    %v797 = vadd.f32 %v550, %v789
    %v798 = vadd.f32 %v551, %v791
    %v799 = vxor.u32 %v795, 2147483648
    %v800 = vxor.u32 %v796, 2147483648
    %v801 = vxor.u32 %v797, 2147483648
    %v802 = vmul.f32 %v799, 1.442695
    %v803 = vpow.pop %v802
    %v804 = vmul.f32 %v800, 1.442695
    %v805 = vpow.pop %v804
    %v806 = vmul.f32 %v801, 1.442695
    %v807 = vpow.pop %v806
    %v808 = vadd.f32 %v803, 1.0
    %v809 = vadd.f32 %v805, 1.0
    %v810 = vadd.f32 %v807, 1.0
    %v811 = vrcp.pop %v808
    %v812 = vmul.f32 1.0, %v811
    %v813 = vrcp.pop %v809
    %v814 = vmul.f32 1.0, %v813
    %v815 = vrcp.pop %v810
    %v816 = vmul.f32 1.0, %v815
    %v817 = vtanh.pop %v798
    %v818 = vmul.f32 %v814, %v544
    %v819 = vmul.f32 %v812, %v817
    %v820 = vadd.f32 %v818, %v819
    %v821 = vtanh.pop %v820
    %v822 = vmul.f32 %v816, %v821
    %s823 = smul.u32 1, 4
    %s824 = smul.addr %s823, 8
    %s825 = scalar_lea.vmem [#allocation4], %s824
    %v826 = vld [vmem:[%s825] sm:$0xff]
    %v827 = vld [vmem:[%s825 + $0x8] sm:$0xff]
    %v828 = vld [vmem:[%s825 + $0x10] sm:$0xff]
    %v829 = vld [vmem:[%s825 + $0x18] sm:$0xff]
    %v830 = vpack.c.bf16 %v822, %v822
    %831 = vmatprep.subr.bf16.mxu0 %v650
    %832 = vmatpush1.bf16.msra.mxu0 %v649
    %833 = vmatprep.subr.bf16.mxu0 %v654
    %834 = vmatpush1.bf16.msra.mxu0 %v653
    %835 = vmatprep.subr.bf16.mxu0 %v658
    %836 = vmatpush1.bf16.msra.mxu0 %v657
    %837 = vmatprep.subr.bf16.mxu0 %v662
    %838 = vmatpush1.bf16.msra.mxu0 %v661
    %839 = vmatprep.subr.bf16.mxu0 %v666
    %840 = vmatpush1.bf16.msra.mxu0 %v665
    %841 = vmatprep.subr.bf16.mxu0 %v670
    %842 = vmatpush1.bf16.msra.mxu0 %v669
    %843 = vmatprep.subr.bf16.mxu0 %v674
    %844 = vmatpush1.bf16.msra.mxu0 %v673
    %845 = vmatprep.subr.bf16.mxu0 %v678
    %846 = vmatpush1.bf16.msra.mxu0 %v677
    %847 = vmatprep.subr.bf16.mxu0 0
    %848 = vmatpush1.bf16.msra.mxu0 0
    %849 = vmatprep.subr.bf16.mxu0 0
    %850 = vmatpush1.bf16.msra.mxu0 0
    %851 = vmatprep.subr.bf16.mxu0 0
    %852 = vmatpush1.bf16.msra.mxu0 0
    %853 = vmatprep.subr.bf16.mxu0 0
    %854 = vmatpush1.bf16.msra.mxu0 0
    %855 = vmatprep.subr.bf16.mxu0 0
    %856 = vmatpush1.bf16.msra.mxu0 0
    %857 = vmatprep.subr.bf16.mxu0 0
    %858 = vmatpush1.bf16.msra.mxu0 0
    %859 = vmatprep.subr.bf16.mxu0 0
    %860 = vmatpush1.bf16.msra.mxu0 0
    %861 = vmatprep.subr.bf16.mxu0 0
    %862 = vmatpush1.bf16.msra.mxu0 0
    %863 = vmatprep.mubr.bf16.mxu0 0
    %864 = vmatmul.mubr.bf16.gmra.mrb[0].mxu0 %v830
    %v865 = vpop.f32.mrb[0].mxu0
    %v866 = vadd.f32 0.0, %v865
    %v867 = vpop.f32.mrb[0].mxu0
    %v868 = vadd.f32 0.0, %v867
    %v869 = vpop.f32.mrb[0].mxu0
    %v870 = vpop.f32.mrb[0].mxu0
    %871 = vdwg.mxu0
    %872 = vmatprep.subr.bf16.mxu0 %v652
    %873 = vmatpush1.bf16.msra.mxu0 %v651
    %874 = vmatprep.subr.bf16.mxu0 %v656
    %875 = vmatpush1.bf16.msra.mxu0 %v655
    %876 = vmatprep.subr.bf16.mxu0 %v660
    %877 = vmatpush1.bf16.msra.mxu0 %v659
    %878 = vmatprep.subr.bf16.mxu0 %v664
    %879 = vmatpush1.bf16.msra.mxu0 %v663
    %880 = vmatprep.subr.bf16.mxu0 %v668
    %881 = vmatpush1.bf16.msra.mxu0 %v667
    %882 = vmatprep.subr.bf16.mxu0 %v672
    %883 = vmatpush1.bf16.msra.mxu0 %v671
    %884 = vmatprep.subr.bf16.mxu0 %v676
    %885 = vmatpush1.bf16.msra.mxu0 %v675
    %886 = vmatprep.subr.bf16.mxu0 %v680
    %887 = vmatpush1.bf16.msra.mxu0 %v679
    %888 = vmatprep.subr.bf16.mxu0 0
    %889 = vmatpush1.bf16.msra.mxu0 0
    %890 = vmatprep.subr.bf16.mxu0 0
    %891 = vmatpush1.bf16.msra.mxu0 0
    %892 = vmatprep.subr.bf16.mxu0 0
    %893 = vmatpush1.bf16.msra.mxu0 0
    %894 = vmatprep.subr.bf16.mxu0 0
    %895 = vmatpush1.bf16.msra.mxu0 0
    %896 = vmatprep.subr.bf16.mxu0 0
    %897 = vmatpush1.bf16.msra.mxu0 0
    %898 = vmatprep.subr.bf16.mxu0 0
    %899 = vmatpush1.bf16.msra.mxu0 0
    %900 = vmatprep.subr.bf16.mxu0 0
    %901 = vmatpush1.bf16.msra.mxu0 0
    %902 = vmatprep.subr.bf16.mxu0 0
    %903 = vmatpush1.bf16.msra.mxu0 0
    %904 = vmatprep.mubr.bf16.mxu0 0
    %905 = vmatmul.mubr.bf16.gmra.mrb[0].mxu0 %v830
    %v906 = vpop.f32.mrb[0].mxu0
    %v907 = vadd.f32 0.0, %v906
    %v908 = vpop.f32.mrb[0].mxu0
    %v909 = vadd.f32 0.0, %v908
    %v910 = vpop.f32.mrb[0].mxu0
    %v911 = vpop.f32.mrb[0].mxu0
    %912 = vdwg.mxu0
    %v913 = vadd.f32 %v826, %v866
    %v914 = vadd.f32 %v827, %v868
    %v915 = vadd.f32 %v828, %v907
    %v916 = vadd.f32 %v829, %v909
    %v917 = vxor.u32 %v913, 2147483648
    %v918 = vxor.u32 %v914, 2147483648
    %v919 = vxor.u32 %v915, 2147483648
    %v920 = vmul.f32 %v917, 1.442695
    %v921 = vpow.pop %v920
    %v922 = vmul.f32 %v918, 1.442695
    %v923 = vpow.pop %v922
    %v924 = vmul.f32 %v919, 1.442695
    %v925 = vpow.pop %v924
    %v926 = vadd.f32 %v921, 1.0
    %v927 = vadd.f32 %v923, 1.0
    %v928 = vadd.f32 %v925, 1.0
    %v929 = vrcp.pop %v926
    %v930 = vmul.f32 1.0, %v929
    %v931 = vrcp.pop %v927
    %v932 = vmul.f32 1.0, %v931
    %v933 = vrcp.pop %v928
    %v934 = vmul.f32 1.0, %v933
    %v935 = vtanh.pop %v916
    %v936 = vmul.f32 %v932, %v820
    %v937 = vmul.f32 %v930, %v935
    %v938 = vadd.f32 %v936, %v937
    %v939 = vtanh.pop %v938
    %v940 = vmul.f32 %v934, %v939
    %s941 = smul.u32 2, 4
    %s942 = smul.addr %s941, 8
    %s943 = scalar_lea.vmem [#allocation4], %s942
    %v944 = vld [vmem:[%s943] sm:$0xff]
    %v945 = vld [vmem:[%s943 + $0x8] sm:$0xff]
    %v946 = vld [vmem:[%s943 + $0x10] sm:$0xff]
    %v947 = vld [vmem:[%s943 + $0x18] sm:$0xff]
    %v948 = vpack.c.bf16 %v940, %v940
    %949 = vmatprep.subr.bf16.mxu0 %v650
    %950 = vmatpush1.bf16.msra.mxu0 %v649
    %951 = vmatprep.subr.bf16.mxu0 %v654
    %952 = vmatpush1.bf16.msra.mxu0 %v653
    %953 = vmatprep.subr.bf16.mxu0 %v658
    %954 = vmatpush1.bf16.msra.mxu0 %v657
    %955 = vmatprep.subr.bf16.mxu0 %v662
    %956 = vmatpush1.bf16.msra.mxu0 %v661
    %957 = vmatprep.subr.bf16.mxu0 %v666
    %958 = vmatpush1.bf16.msra.mxu0 %v665
    %959 = vmatprep.subr.bf16.mxu0 %v670
    %960 = vmatpush1.bf16.msra.mxu0 %v669
    %961 = vmatprep.subr.bf16.mxu0 %v674
    %962 = vmatpush1.bf16.msra.mxu0 %v673
    %963 = vmatprep.subr.bf16.mxu0 %v678
    %964 = vmatpush1.bf16.msra.mxu0 %v677
    %965 = vmatprep.subr.bf16.mxu0 0
    %966 = vmatpush1.bf16.msra.mxu0 0
    %967 = vmatprep.subr.bf16.mxu0 0
    %968 = vmatpush1.bf16.msra.mxu0 0
    %969 = vmatprep.subr.bf16.mxu0 0
    %970 = vmatpush1.bf16.msra.mxu0 0
    %971 = vmatprep.subr.bf16.mxu0 0
    %972 = vmatpush1.bf16.msra.mxu0 0
    %973 = vmatprep.subr.bf16.mxu0 0
    %974 = vmatpush1.bf16.msra.mxu0 0
    %975 = vmatprep.subr.bf16.mxu0 0
    %976 = vmatpush1.bf16.msra.mxu0 0
    %977 = vmatprep.subr.bf16.mxu0 0
    %978 = vmatpush1.bf16.msra.mxu0 0
    %979 = vmatprep.subr.bf16.mxu0 0
    %980 = vmatpush1.bf16.msra.mxu0 0
    %981 = vmatprep.mubr.bf16.mxu0 0
    %982 = vmatmul.mubr.bf16.gmra.mrb[0].mxu0 %v948
    %v983 = vpop.f32.mrb[0].mxu0
    %v984 = vadd.f32 0.0, %v983
    %v985 = vpop.f32.mrb[0].mxu0
    %v986 = vadd.f32 0.0, %v985
    %v987 = vpop.f32.mrb[0].mxu0
    %v988 = vpop.f32.mrb[0].mxu0
    %989 = vdwg.mxu0
    %990 = vmatprep.subr.bf16.mxu0 %v652
    %991 = vmatpush1.bf16.msra.mxu0 %v651
    %992 = vmatprep.subr.bf16.mxu0 %v656
    %993 = vmatpush1.bf16.msra.mxu0 %v655
    %994 = vmatprep.subr.bf16.mxu0 %v660
    %995 = vmatpush1.bf16.msra.mxu0 %v659
    %996 = vmatprep.subr.bf16.mxu0 %v664
    %997 = vmatpush1.bf16.msra.mxu0 %v663
    %998 = vmatprep.subr.bf16.mxu0 %v668
    %999 = vmatpush1.bf16.msra.mxu0 %v667
    %1000 = vmatprep.subr.bf16.mxu0 %v672
    %1001 = vmatpush1.bf16.msra.mxu0 %v671
    %1002 = vmatprep.subr.bf16.mxu0 %v676
    %1003 = vmatpush1.bf16.msra.mxu0 %v675
    %1004 = vmatprep.subr.bf16.mxu0 %v680
    %1005 = vmatpush1.bf16.msra.mxu0 %v679
    %1006 = vmatprep.subr.bf16.mxu0 0
    %1007 = vmatpush1.bf16.msra.mxu0 0
    %1008 = vmatprep.subr.bf16.mxu0 0
    %1009 = vmatpush1.bf16.msra.mxu0 0
    %1010 = vmatprep.subr.bf16.mxu0 0
    %1011 = vmatpush1.bf16.msra.mxu0 0
    %1012 = vmatprep.subr.bf16.mxu0 0
    %1013 = vmatpush1.bf16.msra.mxu0 0
    %1014 = vmatprep.subr.bf16.mxu0 0
    %1015 = vmatpush1.bf16.msra.mxu0 0
    %1016 = vmatprep.subr.bf16.mxu0 0
    %1017 = vmatpush1.bf16.msra.mxu0 0
    %1018 = vmatprep.subr.bf16.mxu0 0
    %1019 = vmatpush1.bf16.msra.mxu0 0
    %1020 = vmatprep.subr.bf16.mxu0 0
    %1021 = vmatpush1.bf16.msra.mxu0 0
    %1022 = vmatprep.mubr.bf16.mxu0 0
    %1023 = vmatmul.mubr.bf16.gmra.mrb[0].mxu0 %v948
    %v1024 = vpop.f32.mrb[0].mxu0
    %v1025 = vadd.f32 0.0, %v1024
    %v1026 = vpop.f32.mrb[0].mxu0
    %v1027 = vadd.f32 0.0, %v1026
    %v1028 = vpop.f32.mrb[0].mxu0
    %v1029 = vpop.f32.mrb[0].mxu0
    %1030 = vdwg.mxu0
    %v1031 = vadd.f32 %v944, %v984
    %v1032 = vadd.f32 %v945, %v986
    %v1033 = vadd.f32 %v946, %v1025
    %v1034 = vadd.f32 %v947, %v1027
    %v1035 = vxor.u32 %v1031, 2147483648
    %v1036 = vxor.u32 %v1032, 2147483648
    %v1037 = vxor.u32 %v1033, 2147483648
    %v1038 = vmul.f32 %v1035, 1.442695
    %v1039 = vpow.pop %v1038
    %v1040 = vmul.f32 %v1036, 1.442695
    %v1041 = vpow.pop %v1040
    %v1042 = vmul.f32 %v1037, 1.442695
    %v1043 = vpow.pop %v1042
    %v1044 = vadd.f32 %v1039, 1.0
    %v1045 = vadd.f32 %v1041, 1.0
    %v1046 = vadd.f32 %v1043, 1.0
    %v1047 = vrcp.pop %v1044
    %v1048 = vmul.f32 1.0, %v1047
    %v1049 = vrcp.pop %v1045
    %v1050 = vmul.f32 1.0, %v1049
    %v1051 = vrcp.pop %v1046
    %v1052 = vmul.f32 1.0, %v1051
    %v1053 = vtanh.pop %v1034
    %v1054 = vmul.f32 %v1050, %v938
    %v1055 = vmul.f32 %v1048, %v1053
    %v1056 = vadd.f32 %v1054, %v1055
    %v1057 = vtanh.pop %v1056
    %v1058 = vmul.f32 %v1052, %v1057
    %s1059 = smul.u32 3, 4
    %s1060 = smul.addr %s1059, 8
    %s1061 = scalar_lea.vmem [#allocation4], %s1060
    %v1062 = vld [vmem:[%s1061] sm:$0xff]
    %v1063 = vld [vmem:[%s1061 + $0x8] sm:$0xff]
    %v1064 = vld [vmem:[%s1061 + $0x10] sm:$0xff]
    %v1065 = vld [vmem:[%s1061 + $0x18] sm:$0xff]
    %v1066 = vpack.c.bf16 %v1058, %v1058
    %1067 = vmatprep.subr.bf16.mxu0 %v650
    %1068 = vmatpush1.bf16.msra.mxu0 %v649
    %1069 = vmatprep.subr.bf16.mxu0 %v654
    %1070 = vmatpush1.bf16.msra.mxu0 %v653
    %1071 = vmatprep.subr.bf16.mxu0 %v658
    %1072 = vmatpush1.bf16.msra.mxu0 %v657
    %1073 = vmatprep.subr.bf16.mxu0 %v662
    %1074 = vmatpush1.bf16.msra.mxu0 %v661
    %1075 = vmatprep.subr.bf16.mxu0 %v666
    %1076 = vmatpush1.bf16.msra.mxu0 %v665
    %1077 = vmatprep.subr.bf16.mxu0 %v670
    %1078 = vmatpush1.bf16.msra.mxu0 %v669
    %1079 = vmatprep.subr.bf16.mxu0 %v674
    %1080 = vmatpush1.bf16.msra.mxu0 %v673
    %1081 = vmatprep.subr.bf16.mxu0 %v678
    %1082 = vmatpush1.bf16.msra.mxu0 %v677
    %1083 = vmatprep.subr.bf16.mxu0 0
    %1084 = vmatpush1.bf16.msra.mxu0 0
    %1085 = vmatprep.subr.bf16.mxu0 0
    %1086 = vmatpush1.bf16.msra.mxu0 0
    %1087 = vmatprep.subr.bf16.mxu0 0
    %1088 = vmatpush1.bf16.msra.mxu0 0
    %1089 = vmatprep.subr.bf16.mxu0 0
    %1090 = vmatpush1.bf16.msra.mxu0 0
    %1091 = vmatprep.subr.bf16.mxu0 0
    %1092 = vmatpush1.bf16.msra.mxu0 0
    %1093 = vmatprep.subr.bf16.mxu0 0
    %1094 = vmatpush1.bf16.msra.mxu0 0
    %1095 = vmatprep.subr.bf16.mxu0 0
    %1096 = vmatpush1.bf16.msra.mxu0 0
    %1097 = vmatprep.subr.bf16.mxu0 0
    %1098 = vmatpush1.bf16.msra.mxu0 0
    %1099 = vmatprep.mubr.bf16.mxu0 0
    %1100 = vmatmul.mubr.bf16.gmra.mrb[0].mxu0 %v1066
    %v1101 = vpop.f32.mrb[0].mxu0
    %v1102 = vadd.f32 0.0, %v1101
    %v1103 = vpop.f32.mrb[0].mxu0
    %v1104 = vadd.f32 0.0, %v1103
    %v1105 = vpop.f32.mrb[0].mxu0
    %v1106 = vpop.f32.mrb[0].mxu0
    %1107 = vdwg.mxu0
    %1108 = vmatprep.subr.bf16.mxu0 %v652
    %1109 = vmatpush1.bf16.msra.mxu0 %v651
    %1110 = vmatprep.subr.bf16.mxu0 %v656
    %1111 = vmatpush1.bf16.msra.mxu0 %v655
    %1112 = vmatprep.subr.bf16.mxu0 %v660
    %1113 = vmatpush1.bf16.msra.mxu0 %v659
    %1114 = vmatprep.subr.bf16.mxu0 %v664
    %1115 = vmatpush1.bf16.msra.mxu0 %v663
    %1116 = vmatprep.subr.bf16.mxu0 %v668
    %1117 = vmatpush1.bf16.msra.mxu0 %v667
    %1118 = vmatprep.subr.bf16.mxu0 %v672
    %1119 = vmatpush1.bf16.msra.mxu0 %v671
    %1120 = vmatprep.subr.bf16.mxu0 %v676
    %1121 = vmatpush1.bf16.msra.mxu0 %v675
    %1122 = vmatprep.subr.bf16.mxu0 %v680
    %1123 = vmatpush1.bf16.msra.mxu0 %v679
    %1124 = vmatprep.subr.bf16.mxu0 0
    %1125 = vmatpush1.bf16.msra.mxu0 0
    %1126 = vmatprep.subr.bf16.mxu0 0
    %1127 = vmatpush1.bf16.msra.mxu0 0
    %1128 = vmatprep.subr.bf16.mxu0 0
    %1129 = vmatpush1.bf16.msra.mxu0 0
    %1130 = vmatprep.subr.bf16.mxu0 0
    %1131 = vmatpush1.bf16.msra.mxu0 0
    %1132 = vmatprep.subr.bf16.mxu0 0
    %1133 = vmatpush1.bf16.msra.mxu0 0
    %1134 = vmatprep.subr.bf16.mxu0 0
    %1135 = vmatpush1.bf16.msra.mxu0 0
    %1136 = vmatprep.subr.bf16.mxu0 0
    %1137 = vmatpush1.bf16.msra.mxu0 0
    %1138 = vmatprep.subr.bf16.mxu0 0
    %1139 = vmatpush1.bf16.msra.mxu0 0
    %1140 = vmatprep.mubr.bf16.mxu0 0
    %1141 = vmatmul.mubr.bf16.gmra.mrb[0].mxu0 %v1066
    %v1142 = vpop.f32.mrb[0].mxu0
    %v1143 = vadd.f32 0.0, %v1142
    %v1144 = vpop.f32.mrb[0].mxu0
    %v1145 = vadd.f32 0.0, %v1144
    %v1146 = vpop.f32.mrb[0].mxu0
    %v1147 = vpop.f32.mrb[0].mxu0
    %1148 = vdwg.mxu0
    %v1149 = vadd.f32 %v1062, %v1102
    %v1150 = vadd.f32 %v1063, %v1104
    %v1151 = vadd.f32 %v1064, %v1143
    %v1152 = vadd.f32 %v1065, %v1145
    %v1153 = vxor.u32 %v1149, 2147483648
    %v1154 = vxor.u32 %v1150, 2147483648
    %v1155 = vxor.u32 %v1151, 2147483648
    %v1156 = vmul.f32 %v1153, 1.442695
    %v1157 = vpow.pop %v1156
    %v1158 = vmul.f32 %v1154, 1.442695
    %v1159 = vpow.pop %v1158
    %v1160 = vmul.f32 %v1155, 1.442695
    %v1161 = vpow.pop %v1160
    %v1162 = vadd.f32 %v1157, 1.0
    %v1163 = vadd.f32 %v1159, 1.0
    %v1164 = vadd.f32 %v1161, 1.0
    %v1165 = vrcp.pop %v1162
    %v1166 = vmul.f32 1.0, %v1165
    %v1167 = vrcp.pop %v1163
    %v1168 = vmul.f32 1.0, %v1167
    %v1169 = vrcp.pop %v1164
    %v1170 = vmul.f32 1.0, %v1169
    %v1171 = vtanh.pop %v1152
    %v1172 = vmul.f32 %v1168, %v1056
    %v1173 = vmul.f32 %v1166, %v1171
    %v1174 = vadd.f32 %v1172, %v1173
    %v1175 = vtanh.pop %v1174
    %v1176 = vmul.f32 %v1170, %v1175
    %s1177 = smul.u32 4, 4
    %s1178 = smul.addr %s1177, 8
    %s1179 = scalar_lea.vmem [#allocation4], %s1178
    %v1180 = vld [vmem:[%s1179] sm:$0xff]
    %v1181 = vld [vmem:[%s1179 + $0x8] sm:$0xff]
    %v1182 = vld [vmem:[%s1179 + $0x10] sm:$0xff]
    %v1183 = vld [vmem:[%s1179 + $0x18] sm:$0xff]
    %v1184 = vpack.c.bf16 %v1176, %v1176
    %1185 = vmatprep.subr.bf16.mxu0 %v650
    %1186 = vmatpush1.bf16.msra.mxu0 %v649
    %1187 = vmatprep.subr.bf16.mxu0 %v654
    %1188 = vmatpush1.bf16.msra.mxu0 %v653
    %1189 = vmatprep.subr.bf16.mxu0 %v658
    %1190 = vmatpush1.bf16.msra.mxu0 %v657
    %1191 = vmatprep.subr.bf16.mxu0 %v662
    %1192 = vmatpush1.bf16.msra.mxu0 %v661
    %1193 = vmatprep.subr.bf16.mxu0 %v666
    %1194 = vmatpush1.bf16.msra.mxu0 %v665
    %1195 = vmatprep.subr.bf16.mxu0 %v670
    %1196 = vmatpush1.bf16.msra.mxu0 %v669
    %1197 = vmatprep.subr.bf16.mxu0 %v674
    %1198 = vmatpush1.bf16.msra.mxu0 %v673
    %1199 = vmatprep.subr.bf16.mxu0 %v678
    %1200 = vmatpush1.bf16.msra.mxu0 %v677
    %1201 = vmatprep.subr.bf16.mxu0 0
    %1202 = vmatpush1.bf16.msra.mxu0 0
    %1203 = vmatprep.subr.bf16.mxu0 0
    %1204 = vmatpush1.bf16.msra.mxu0 0
    %1205 = vmatprep.subr.bf16.mxu0 0
    %1206 = vmatpush1.bf16.msra.mxu0 0
    %1207 = vmatprep.subr.bf16.mxu0 0
    %1208 = vmatpush1.bf16.msra.mxu0 0
    %1209 = vmatprep.subr.bf16.mxu0 0
    %1210 = vmatpush1.bf16.msra.mxu0 0
    %1211 = vmatprep.subr.bf16.mxu0 0
    %1212 = vmatpush1.bf16.msra.mxu0 0
    %1213 = vmatprep.subr.bf16.mxu0 0
    %1214 = vmatpush1.bf16.msra.mxu0 0
    %1215 = vmatprep.subr.bf16.mxu0 0
    %1216 = vmatpush1.bf16.msra.mxu0 0
    %1217 = vmatprep.mubr.bf16.mxu0 0
    %1218 = vmatmul.mubr.bf16.gmra.mrb[0].mxu0 %v1184
    %v1219 = vpop.f32.mrb[0].mxu0
    %v1220 = vadd.f32 0.0, %v1219
    %v1221 = vpop.f32.mrb[0].mxu0
    %v1222 = vadd.f32 0.0, %v1221
    %v1223 = vpop.f32.mrb[0].mxu0
    %v1224 = vpop.f32.mrb[0].mxu0
    %1225 = vdwg.mxu0
    %1226 = vmatprep.subr.bf16.mxu0 %v652
    %1227 = vmatpush1.bf16.msra.mxu0 %v651
    %1228 = vmatprep.subr.bf16.mxu0 %v656
    %1229 = vmatpush1.bf16.msra.mxu0 %v655
    %1230 = vmatprep.subr.bf16.mxu0 %v660
    %1231 = vmatpush1.bf16.msra.mxu0 %v659
    %1232 = vmatprep.subr.bf16.mxu0 %v664
    %1233 = vmatpush1.bf16.msra.mxu0 %v663
    %1234 = vmatprep.subr.bf16.mxu0 %v668
    %1235 = vmatpush1.bf16.msra.mxu0 %v667
    %1236 = vmatprep.subr.bf16.mxu0 %v672
    %1237 = vmatpush1.bf16.msra.mxu0 %v671
    %1238 = vmatprep.subr.bf16.mxu0 %v676
    %1239 = vmatpush1.bf16.msra.mxu0 %v675
    %1240 = vmatprep.subr.bf16.mxu0 %v680
    %1241 = vmatpush1.bf16.msra.mxu0 %v679
    %1242 = vmatprep.subr.bf16.mxu0 0
    %1243 = vmatpush1.bf16.msra.mxu0 0
    %1244 = vmatprep.subr.bf16.mxu0 0
    %1245 = vmatpush1.bf16.msra.mxu0 0
    %1246 = vmatprep.subr.bf16.mxu0 0
    %1247 = vmatpush1.bf16.msra.mxu0 0
    %1248 = vmatprep.subr.bf16.mxu0 0
    %1249 = vmatpush1.bf16.msra.mxu0 0
    %1250 = vmatprep.subr.bf16.mxu0 0
    %1251 = vmatpush1.bf16.msra.mxu0 0
    %1252 = vmatprep.subr.bf16.mxu0 0
    %1253 = vmatpush1.bf16.msra.mxu0 0
    %1254 = vmatprep.subr.bf16.mxu0 0
    %1255 = vmatpush1.bf16.msra.mxu0 0
    %1256 = vmatprep.subr.bf16.mxu0 0
    %1257 = vmatpush1.bf16.msra.mxu0 0
    %1258 = vmatprep.mubr.bf16.mxu0 0
    %1259 = vmatmul.mubr.bf16.gmra.mrb[0].mxu0 %v1184
    %v1260 = vpop.f32.mrb[0].mxu0
    %v1261 = vadd.f32 0.0, %v1260
    %v1262 = vpop.f32.mrb[0].mxu0
    %v1263 = vadd.f32 0.0, %v1262
    %v1264 = vpop.f32.mrb[0].mxu0
    %v1265 = vpop.f32.mrb[0].mxu0
    %1266 = vdwg.mxu0
    %v1267 = vadd.f32 %v1180, %v1220
    %v1268 = vadd.f32 %v1181, %v1222
    %v1269 = vadd.f32 %v1182, %v1261
    %v1270 = vadd.f32 %v1183, %v1263
    %v1271 = vxor.u32 %v1267, 2147483648
    %v1272 = vxor.u32 %v1268, 2147483648
    %v1273 = vxor.u32 %v1269, 2147483648
    %v1274 = vmul.f32 %v1271, 1.442695
    %v1275 = vpow.pop %v1274
    %v1276 = vmul.f32 %v1272, 1.442695
    %v1277 = vpow.pop %v1276
    %v1278 = vmul.f32 %v1273, 1.442695
    %v1279 = vpow.pop %v1278
    %v1280 = vadd.f32 %v1275, 1.0
    %v1281 = vadd.f32 %v1277, 1.0
    %v1282 = vadd.f32 %v1279, 1.0
    %v1283 = vrcp.pop %v1280
    %v1284 = vmul.f32 1.0, %v1283
    %v1285 = vrcp.pop %v1281
    %v1286 = vmul.f32 1.0, %v1285
    %v1287 = vrcp.pop %v1282
    %v1288 = vmul.f32 1.0, %v1287
    %v1289 = vtanh.pop %v1270
    %v1290 = vmul.f32 %v1286, %v1174
    %v1291 = vmul.f32 %v1284, %v1289
    %v1292 = vadd.f32 %v1290, %v1291
    %v1293 = vtanh.pop %v1292
    %v1294 = vmul.f32 %v1288, %v1293
    %s1295 = smul.u32 5, 4
    %s1296 = smul.addr %s1295, 8
    %s1297 = scalar_lea.vmem [#allocation4], %s1296
    %v1298 = vld [vmem:[%s1297] sm:$0xff]
    %v1299 = vld [vmem:[%s1297 + $0x8] sm:$0xff]
    %v1300 = vld [vmem:[%s1297 + $0x10] sm:$0xff]
    %v1301 = vld [vmem:[%s1297 + $0x18] sm:$0xff]
    %v1302 = vpack.c.bf16 %v1294, %v1294
    %1303 = vmatprep.subr.bf16.mxu0 %v650
    %1304 = vmatpush1.bf16.msra.mxu0 %v649
    %1305 = vmatprep.subr.bf16.mxu0 %v654
    %1306 = vmatpush1.bf16.msra.mxu0 %v653
    %1307 = vmatprep.subr.bf16.mxu0 %v658
    %1308 = vmatpush1.bf16.msra.mxu0 %v657
    %1309 = vmatprep.subr.bf16.mxu0 %v662
    %1310 = vmatpush1.bf16.msra.mxu0 %v661
    %1311 = vmatprep.subr.bf16.mxu0 %v666
    %1312 = vmatpush1.bf16.msra.mxu0 %v665
    %1313 = vmatprep.subr.bf16.mxu0 %v670
    %1314 = vmatpush1.bf16.msra.mxu0 %v669
    %1315 = vmatprep.subr.bf16.mxu0 %v674
    %1316 = vmatpush1.bf16.msra.mxu0 %v673
    %1317 = vmatprep.subr.bf16.mxu0 %v678
    %1318 = vmatpush1.bf16.msra.mxu0 %v677
    %1319 = vmatprep.subr.bf16.mxu0 0
    %1320 = vmatpush1.bf16.msra.mxu0 0
    %1321 = vmatprep.subr.bf16.mxu0 0
    %1322 = vmatpush1.bf16.msra.mxu0 0
    %1323 = vmatprep.subr.bf16.mxu0 0
    %1324 = vmatpush1.bf16.msra.mxu0 0
    %1325 = vmatprep.subr.bf16.mxu0 0
    %1326 = vmatpush1.bf16.msra.mxu0 0
    %1327 = vmatprep.subr.bf16.mxu0 0
    %1328 = vmatpush1.bf16.msra.mxu0 0
    %1329 = vmatprep.subr.bf16.mxu0 0
    %1330 = vmatpush1.bf16.msra.mxu0 0
    %1331 = vmatprep.subr.bf16.mxu0 0
    %1332 = vmatpush1.bf16.msra.mxu0 0
    %1333 = vmatprep.subr.bf16.mxu0 0
    %1334 = vmatpush1.bf16.msra.mxu0 0
    %1335 = vmatprep.mubr.bf16.mxu0 0
    %1336 = vmatmul.mubr.bf16.gmra.mrb[0].mxu0 %v1302
    %v1337 = vpop.f32.mrb[0].mxu0
    %v1338 = vadd.f32 0.0, %v1337
    %v1339 = vpop.f32.mrb[0].mxu0
    %v1340 = vadd.f32 0.0, %v1339
    %v1341 = vpop.f32.mrb[0].mxu0
    %v1342 = vpop.f32.mrb[0].mxu0
    %1343 = vdwg.mxu0
    %1344 = vmatprep.subr.bf16.mxu0 %v652
    %1345 = vmatpush1.bf16.msra.mxu0 %v651
    %1346 = vmatprep.subr.bf16.mxu0 %v656
    %1347 = vmatpush1.bf16.msra.mxu0 %v655
    %1348 = vmatprep.subr.bf16.mxu0 %v660
    %1349 = vmatpush1.bf16.msra.mxu0 %v659
    %1350 = vmatprep.subr.bf16.mxu0 %v664
    %1351 = vmatpush1.bf16.msra.mxu0 %v663
    %1352 = vmatprep.subr.bf16.mxu0 %v668
    %1353 = vmatpush1.bf16.msra.mxu0 %v667
    %1354 = vmatprep.subr.bf16.mxu0 %v672
    %1355 = vmatpush1.bf16.msra.mxu0 %v671
    %1356 = vmatprep.subr.bf16.mxu0 %v676
    %1357 = vmatpush1.bf16.msra.mxu0 %v675
    %1358 = vmatprep.subr.bf16.mxu0 %v680
    %1359 = vmatpush1.bf16.msra.mxu0 %v679
    %1360 = vmatprep.subr.bf16.mxu0 0
    %1361 = vmatpush1.bf16.msra.mxu0 0
    %1362 = vmatprep.subr.bf16.mxu0 0
    %1363 = vmatpush1.bf16.msra.mxu0 0
    %1364 = vmatprep.subr.bf16.mxu0 0
    %1365 = vmatpush1.bf16.msra.mxu0 0
    %1366 = vmatprep.subr.bf16.mxu0 0
    %1367 = vmatpush1.bf16.msra.mxu0 0
    %1368 = vmatprep.subr.bf16.mxu0 0
    %1369 = vmatpush1.bf16.msra.mxu0 0
    %1370 = vmatprep.subr.bf16.mxu0 0
    %1371 = vmatpush1.bf16.msra.mxu0 0
    %1372 = vmatprep.subr.bf16.mxu0 0
    %1373 = vmatpush1.bf16.msra.mxu0 0
    %1374 = vmatprep.subr.bf16.mxu0 0
    %1375 = vmatpush1.bf16.msra.mxu0 0
    %1376 = vmatprep.mubr.bf16.mxu0 0
    %1377 = vmatmul.mubr.bf16.gmra.mrb[0].mxu0 %v1302
    %v1378 = vpop.f32.mrb[0].mxu0
    %v1379 = vadd.f32 0.0, %v1378
    %v1380 = vpop.f32.mrb[0].mxu0
    %v1381 = vadd.f32 0.0, %v1380
    %v1382 = vpop.f32.mrb[0].mxu0
    %v1383 = vpop.f32.mrb[0].mxu0
    %1384 = vdwg.mxu0
    %v1385 = vadd.f32 %v1298, %v1338
    %v1386 = vadd.f32 %v1299, %v1340
    %v1387 = vadd.f32 %v1300, %v1379
    %v1388 = vadd.f32 %v1301, %v1381
    %v1389 = vxor.u32 %v1385, 2147483648
    %v1390 = vxor.u32 %v1386, 2147483648
    %v1391 = vxor.u32 %v1387, 2147483648
    %v1392 = vmul.f32 %v1389, 1.442695
    %v1393 = vpow.pop %v1392
    %v1394 = vmul.f32 %v1390, 1.442695
    %v1395 = vpow.pop %v1394
    %v1396 = vmul.f32 %v1391, 1.442695
    %v1397 = vpow.pop %v1396
    %v1398 = vadd.f32 %v1393, 1.0
    %v1399 = vadd.f32 %v1395, 1.0
    %v1400 = vadd.f32 %v1397, 1.0
    %v1401 = vrcp.pop %v1398
    %v1402 = vmul.f32 1.0, %v1401
    %v1403 = vrcp.pop %v1399
    %v1404 = vmul.f32 1.0, %v1403
    %v1405 = vrcp.pop %v1400
    %v1406 = vmul.f32 1.0, %v1405
    %v1407 = vtanh.pop %v1388
    %v1408 = vmul.f32 %v1404, %v1292
    %v1409 = vmul.f32 %v1402, %v1407
    %v1410 = vadd.f32 %v1408, %v1409
    %v1411 = vtanh.pop %v1410
    %v1412 = vmul.f32 %v1406, %v1411
    %s1413 = smul.u32 6, 4
    %s1414 = smul.addr %s1413, 8
    %s1415 = scalar_lea.vmem [#allocation4], %s1414
    %v1416 = vld [vmem:[%s1415] sm:$0xff]
    %v1417 = vld [vmem:[%s1415 + $0x8] sm:$0xff]
    %v1418 = vld [vmem:[%s1415 + $0x10] sm:$0xff]
    %v1419 = vld [vmem:[%s1415 + $0x18] sm:$0xff]
    %v1420 = vpack.c.bf16 %v1412, %v1412
    %1421 = vmatprep.subr.bf16.mxu0 %v650
    %1422 = vmatpush1.bf16.msra.mxu0 %v649
    %1423 = vmatprep.subr.bf16.mxu0 %v654
    %1424 = vmatpush1.bf16.msra.mxu0 %v653
    %1425 = vmatprep.subr.bf16.mxu0 %v658
    %1426 = vmatpush1.bf16.msra.mxu0 %v657
    %1427 = vmatprep.subr.bf16.mxu0 %v662
    %1428 = vmatpush1.bf16.msra.mxu0 %v661
    %1429 = vmatprep.subr.bf16.mxu0 %v666
    %1430 = vmatpush1.bf16.msra.mxu0 %v665
    %1431 = vmatprep.subr.bf16.mxu0 %v670
    %1432 = vmatpush1.bf16.msra.mxu0 %v669
    %1433 = vmatprep.subr.bf16.mxu0 %v674
    %1434 = vmatpush1.bf16.msra.mxu0 %v673
    %1435 = vmatprep.subr.bf16.mxu0 %v678
    %1436 = vmatpush1.bf16.msra.mxu0 %v677
    %1437 = vmatprep.subr.bf16.mxu0 0
    %1438 = vmatpush1.bf16.msra.mxu0 0
    %1439 = vmatprep.subr.bf16.mxu0 0
    %1440 = vmatpush1.bf16.msra.mxu0 0
    %1441 = vmatprep.subr.bf16.mxu0 0
    %1442 = vmatpush1.bf16.msra.mxu0 0
    %1443 = vmatprep.subr.bf16.mxu0 0
    %1444 = vmatpush1.bf16.msra.mxu0 0
    %1445 = vmatprep.subr.bf16.mxu0 0
    %1446 = vmatpush1.bf16.msra.mxu0 0
    %1447 = vmatprep.subr.bf16.mxu0 0
    %1448 = vmatpush1.bf16.msra.mxu0 0
    %1449 = vmatprep.subr.bf16.mxu0 0
    %1450 = vmatpush1.bf16.msra.mxu0 0
    %1451 = vmatprep.subr.bf16.mxu0 0
    %1452 = vmatpush1.bf16.msra.mxu0 0
    %1453 = vmatprep.mubr.bf16.mxu0 0
    %1454 = vmatmul.mubr.bf16.gmra.mrb[0].mxu0 %v1420
    %v1455 = vpop.f32.mrb[0].mxu0
    %v1456 = vadd.f32 0.0, %v1455
    %v1457 = vpop.f32.mrb[0].mxu0
    %v1458 = vadd.f32 0.0, %v1457
    %v1459 = vpop.f32.mrb[0].mxu0
    %v1460 = vpop.f32.mrb[0].mxu0
    %1461 = vdwg.mxu0
    %1462 = vmatprep.subr.bf16.mxu0 %v652
    %1463 = vmatpush1.bf16.msra.mxu0 %v651
    %1464 = vmatprep.subr.bf16.mxu0 %v656
    %1465 = vmatpush1.bf16.msra.mxu0 %v655
    %1466 = vmatprep.subr.bf16.mxu0 %v660
    %1467 = vmatpush1.bf16.msra.mxu0 %v659
    %1468 = vmatprep.subr.bf16.mxu0 %v664
    %1469 = vmatpush1.bf16.msra.mxu0 %v663
    %1470 = vmatprep.subr.bf16.mxu0 %v668
    %1471 = vmatpush1.bf16.msra.mxu0 %v667
    %1472 = vmatprep.subr.bf16.mxu0 %v672
    %1473 = vmatpush1.bf16.msra.mxu0 %v671
    %1474 = vmatprep.subr.bf16.mxu0 %v676
    %1475 = vmatpush1.bf16.msra.mxu0 %v675
    %1476 = vmatprep.subr.bf16.mxu0 %v680
    %1477 = vmatpush1.bf16.msra.mxu0 %v679
    %1478 = vmatprep.subr.bf16.mxu0 0
    %1479 = vmatpush1.bf16.msra.mxu0 0
    %1480 = vmatprep.subr.bf16.mxu0 0
    %1481 = vmatpush1.bf16.msra.mxu0 0
    %1482 = vmatprep.subr.bf16.mxu0 0
    %1483 = vmatpush1.bf16.msra.mxu0 0
    %1484 = vmatprep.subr.bf16.mxu0 0
    %1485 = vmatpush1.bf16.msra.mxu0 0
    %1486 = vmatprep.subr.bf16.mxu0 0
    %1487 = vmatpush1.bf16.msra.mxu0 0
    %1488 = vmatprep.subr.bf16.mxu0 0
    %1489 = vmatpush1.bf16.msra.mxu0 0
    %1490 = vmatprep.subr.bf16.mxu0 0
    %1491 = vmatpush1.bf16.msra.mxu0 0
    %1492 = vmatprep.subr.bf16.mxu0 0
    %1493 = vmatpush1.bf16.msra.mxu0 0
    %1494 = vmatprep.mubr.bf16.mxu0 0
    %1495 = vmatmul.mubr.bf16.gmra.mrb[0].mxu0 %v1420
    %v1496 = vpop.f32.mrb[0].mxu0
    %v1497 = vadd.f32 0.0, %v1496
    %v1498 = vpop.f32.mrb[0].mxu0
    %v1499 = vadd.f32 0.0, %v1498
    %v1500 = vpop.f32.mrb[0].mxu0
    %v1501 = vpop.f32.mrb[0].mxu0
    %1502 = vdwg.mxu0
    %v1503 = vadd.f32 %v1416, %v1456
    %v1504 = vadd.f32 %v1417, %v1458
    %v1505 = vadd.f32 %v1418, %v1497
    %v1506 = vadd.f32 %v1419, %v1499
    %v1507 = vxor.u32 %v1503, 2147483648
    %v1508 = vxor.u32 %v1504, 2147483648
    %v1509 = vxor.u32 %v1505, 2147483648
    %v1510 = vmul.f32 %v1507, 1.442695
    %v1511 = vpow.pop %v1510
    %v1512 = vmul.f32 %v1508, 1.442695
    %v1513 = vpow.pop %v1512
    %v1514 = vmul.f32 %v1509, 1.442695
    %v1515 = vpow.pop %v1514
    %v1516 = vadd.f32 %v1511, 1.0
    %v1517 = vadd.f32 %v1513, 1.0
    %v1518 = vadd.f32 %v1515, 1.0
    %v1519 = vrcp.pop %v1516
    %v1520 = vmul.f32 1.0, %v1519
    %v1521 = vrcp.pop %v1517
    %v1522 = vmul.f32 1.0, %v1521
    %v1523 = vrcp.pop %v1518
    %v1524 = vmul.f32 1.0, %v1523
    %v1525 = vtanh.pop %v1506
    %v1526 = vmul.f32 %v1522, %v1410
    %v1527 = vmul.f32 %v1520, %v1525
    %v1528 = vadd.f32 %v1526, %v1527
    %v1529 = vtanh.pop %v1528
    %v1530 = vmul.f32 %v1524, %v1529
    %s1531 = smul.u32 7, 4
    %s1532 = smul.addr %s1531, 8
    %s1533 = scalar_lea.vmem [#allocation4], %s1532
    %v1534 = vld [vmem:[%s1533] sm:$0xff]
    %v1535 = vld [vmem:[%s1533 + $0x8] sm:$0xff]
    %v1536 = vld [vmem:[%s1533 + $0x10] sm:$0xff]
    %v1537 = vld [vmem:[%s1533 + $0x18] sm:$0xff]
    %v1538 = vpack.c.bf16 %v1530, %v1530
    %1539 = vmatprep.subr.bf16.mxu0 %v650
    %1540 = vmatpush1.bf16.msra.mxu0 %v649
    %1541 = vmatprep.subr.bf16.mxu0 %v654
    %1542 = vmatpush1.bf16.msra.mxu0 %v653
    %1543 = vmatprep.subr.bf16.mxu0 %v658
    %1544 = vmatpush1.bf16.msra.mxu0 %v657
    %1545 = vmatprep.subr.bf16.mxu0 %v662
    %1546 = vmatpush1.bf16.msra.mxu0 %v661
    %1547 = vmatprep.subr.bf16.mxu0 %v666
    %1548 = vmatpush1.bf16.msra.mxu0 %v665
    %1549 = vmatprep.subr.bf16.mxu0 %v670
    %1550 = vmatpush1.bf16.msra.mxu0 %v669
    %1551 = vmatprep.subr.bf16.mxu0 %v674
    %1552 = vmatpush1.bf16.msra.mxu0 %v673
    %1553 = vmatprep.subr.bf16.mxu0 %v678
    %1554 = vmatpush1.bf16.msra.mxu0 %v677
    %1555 = vmatprep.subr.bf16.mxu0 0
    %1556 = vmatpush1.bf16.msra.mxu0 0
    %1557 = vmatprep.subr.bf16.mxu0 0
    %1558 = vmatpush1.bf16.msra.mxu0 0
    %1559 = vmatprep.subr.bf16.mxu0 0
    %1560 = vmatpush1.bf16.msra.mxu0 0
    %1561 = vmatprep.subr.bf16.mxu0 0
    %1562 = vmatpush1.bf16.msra.mxu0 0
    %1563 = vmatprep.subr.bf16.mxu0 0
    %1564 = vmatpush1.bf16.msra.mxu0 0
    %1565 = vmatprep.subr.bf16.mxu0 0
    %1566 = vmatpush1.bf16.msra.mxu0 0
    %1567 = vmatprep.subr.bf16.mxu0 0
    %1568 = vmatpush1.bf16.msra.mxu0 0
    %1569 = vmatprep.subr.bf16.mxu0 0
    %1570 = vmatpush1.bf16.msra.mxu0 0
    %1571 = vmatprep.mubr.bf16.mxu0 0
    %1572 = vmatmul.mubr.bf16.gmra.mrb[0].mxu0 %v1538
    %v1573 = vpop.f32.mrb[0].mxu0
    %v1574 = vadd.f32 0.0, %v1573
    %v1575 = vpop.f32.mrb[0].mxu0
    %v1576 = vadd.f32 0.0, %v1575
    %v1577 = vpop.f32.mrb[0].mxu0
    %v1578 = vpop.f32.mrb[0].mxu0
    %1579 = vdwg.mxu0
    %1580 = vmatprep.subr.bf16.mxu0 %v652
    %1581 = vmatpush1.bf16.msra.mxu0 %v651
    %1582 = vmatprep.subr.bf16.mxu0 %v656
    %1583 = vmatpush1.bf16.msra.mxu0 %v655
    %1584 = vmatprep.subr.bf16.mxu0 %v660
    %1585 = vmatpush1.bf16.msra.mxu0 %v659
    %1586 = vmatprep.subr.bf16.mxu0 %v664
    %1587 = vmatpush1.bf16.msra.mxu0 %v663
    %1588 = vmatprep.subr.bf16.mxu0 %v668
    %1589 = vmatpush1.bf16.msra.mxu0 %v667
    %1590 = vmatprep.subr.bf16.mxu0 %v672
    %1591 = vmatpush1.bf16.msra.mxu0 %v671
    %1592 = vmatprep.subr.bf16.mxu0 %v676
    %1593 = vmatpush1.bf16.msra.mxu0 %v675
    %1594 = vmatprep.subr.bf16.mxu0 %v680
    %1595 = vmatpush1.bf16.msra.mxu0 %v679
    %1596 = vmatprep.subr.bf16.mxu0 0
    %1597 = vmatpush1.bf16.msra.mxu0 0
    %1598 = vmatprep.subr.bf16.mxu0 0
    %1599 = vmatpush1.bf16.msra.mxu0 0
    %1600 = vmatprep.subr.bf16.mxu0 0
    %1601 = vmatpush1.bf16.msra.mxu0 0
    %1602 = vmatprep.subr.bf16.mxu0 0
    %1603 = vmatpush1.bf16.msra.mxu0 0
    %1604 = vmatprep.subr.bf16.mxu0 0
    %1605 = vmatpush1.bf16.msra.mxu0 0
    %1606 = vmatprep.subr.bf16.mxu0 0
    %1607 = vmatpush1.bf16.msra.mxu0 0
    %1608 = vmatprep.subr.bf16.mxu0 0
    %1609 = vmatpush1.bf16.msra.mxu0 0
    %1610 = vmatprep.subr.bf16.mxu0 0
    %1611 = vmatpush1.bf16.msra.mxu0 0
    %1612 = vmatprep.mubr.bf16.mxu0 0
    %1613 = vmatmul.mubr.bf16.gmra.mrb[0].mxu0 %v1538
    %v1614 = vpop.f32.mrb[0].mxu0
    %v1615 = vadd.f32 0.0, %v1614
    %v1616 = vpop.f32.mrb[0].mxu0
    %v1617 = vadd.f32 0.0, %v1616
    %v1618 = vpop.f32.mrb[0].mxu0
    %v1619 = vpop.f32.mrb[0].mxu0
    %1620 = vdwg.mxu0
    %v1621 = vadd.f32 %v1534, %v1574
    %v1622 = vadd.f32 %v1535, %v1576
    %v1623 = vadd.f32 %v1536, %v1615
    %v1624 = vadd.f32 %v1537, %v1617
    %v1625 = vxor.u32 %v1621, 2147483648
    %v1626 = vxor.u32 %v1622, 2147483648
    %v1627 = vxor.u32 %v1623, 2147483648
    %v1628 = vmul.f32 %v1625, 1.442695
    %v1629 = vpow.pop %v1628
    %v1630 = vmul.f32 %v1626, 1.442695
    %v1631 = vpow.pop %v1630
    %v1632 = vmul.f32 %v1627, 1.442695
    %v1633 = vpow.pop %v1632
    %v1634 = vadd.f32 %v1629, 1.0
    %v1635 = vadd.f32 %v1631, 1.0
    %v1636 = vadd.f32 %v1633, 1.0
    %v1637 = vrcp.pop %v1634
    %v1638 = vmul.f32 1.0, %v1637
    %v1639 = vrcp.pop %v1635
    %v1640 = vmul.f32 1.0, %v1639
    %v1641 = vrcp.pop %v1636
    %v1642 = vmul.f32 1.0, %v1641
    %v1643 = vtanh.pop %v1624
    %v1644 = vmul.f32 %v1640, %v1528
    %v1645 = vmul.f32 %v1638, %v1643
    %v1646 = vadd.f32 %v1644, %v1645
    %v1647 = vtanh.pop %v1646
    %v1648 = vmul.f32 %v1642, %v1647
    %1649 = vst [vmem:[#allocation2] sm:$0xff] %v1648
    %1650 = vst [vmem:[#allocation3] sm:$0xff] %v1646
    // Predicated region
    $region46: #{tpu_custom_call.1} parent=1 // pred_check
      %p1651 = pneg %p80
    $region47: #{tpu_custom_call.1} parent=1 // pred_check_branch
      %1653 = sbr.rel (%p1651) target = $region49
    $region48: #{tpu_custom_call.1} parent=1 // pred_region
      %v1654 = vpack.c.bf16 %v1648, %v1648
      %v1655 = vld [vmem:[#allocation11] sm:$0xf]
      %v1656 = vld [vmem:[#allocation11 + $0x4] sm:$0xf]
      %v1657 = vld [vmem:[#allocation11 + $0x8] sm:$0xf]
      %v1658 = vld [vmem:[#allocation11 + $0xc] sm:$0xf]
      %v1659 = vld [vmem:[#allocation11 + $0x10] sm:$0xf]
      %v1660 = vld [vmem:[#allocation11 + $0x14] sm:$0xf]
      %v1661 = vld [vmem:[#allocation11 + $0x18] sm:$0xf]
      %v1662 = vld [vmem:[#allocation11 + $0x1c] sm:$0xf]
      %v1663 = vld [vmem:[#allocation11 + $0x20] sm:$0xf]
      %v1664 = vld [vmem:[#allocation11 + $0x24] sm:$0xf]
      %v1665 = vld [vmem:[#allocation11 + $0x28] sm:$0xf]
      %v1666 = vld [vmem:[#allocation11 + $0x2c] sm:$0xf]
      %v1667 = vld [vmem:[#allocation11 + $0x30] sm:$0xf]
      %v1668 = vld [vmem:[#allocation11 + $0x34] sm:$0xf]
      %v1669 = vld [vmem:[#allocation11 + $0x38] sm:$0xf]
      %v1670 = vld [vmem:[#allocation11 + $0x3c] sm:$0xf]
      %v1671 = vld [vmem:[%s5] sm:$0x1]
      %v1673 = vlaneseq
      %v1674 = vshrl.u32 %v1673, 7
      %v1675 = vsub.s32 0, %v1674
      %v1676 = vrot.slane %v1671, %v1675
      %v1694 = vunpack.c.l.b16 %v1655
      %v1695 = vunpack.c.l.b16 %v1656
      %v1696 = vunpack.c.l.b16 %v1657
      %v1697 = vunpack.c.l.b16 %v1658
      %v1698 = vunpack.c.l.b16 %v1659
      %v1699 = vunpack.c.l.b16 %v1660
      %v1700 = vunpack.c.l.b16 %v1661
      %v1701 = vunpack.c.l.b16 %v1662
      %v1702 = vunpack.c.l.b16 %v1663
      %v1703 = vunpack.c.l.b16 %v1664
      %v1704 = vunpack.c.l.b16 %v1665
      %v1705 = vunpack.c.l.b16 %v1666
      %v1706 = vunpack.c.l.b16 %v1667
      %v1707 = vunpack.c.l.b16 %v1668
      %v1708 = vunpack.c.l.b16 %v1669
      %v1709 = vunpack.c.l.b16 %v1670
      %v1710 = vpack.c.b16 %v1695, %v1694
      %v1711 = vpack.c.b16 %v1697, %v1696
      %v1712 = vpack.c.b16 %v1699, %v1698
      %v1713 = vpack.c.b16 %v1701, %v1700
      %v1714 = vpack.c.b16 %v1703, %v1702
      %v1715 = vpack.c.b16 %v1705, %v1704
      %v1716 = vpack.c.b16 %v1707, %v1706
      %v1717 = vpack.c.b16 %v1709, %v1708
      %1726 = vmatprep.subr.bf16.mxu0 0
      %1727 = vmatpush1.bf16.msra.mxu0 %v1710
      %1728 = vmatprep.subr.bf16.mxu0 0
      %1729 = vmatpush1.bf16.msra.mxu0 %v1711
      %1730 = vmatprep.subr.bf16.mxu0 0
      %1731 = vmatpush1.bf16.msra.mxu0 %v1712
      %1732 = vmatprep.subr.bf16.mxu0 0
      %1733 = vmatpush1.bf16.msra.mxu0 %v1713
      %1734 = vmatprep.subr.bf16.mxu0 0
      %1735 = vmatpush1.bf16.msra.mxu0 %v1714
      %1736 = vmatprep.subr.bf16.mxu0 0
      %1737 = vmatpush1.bf16.msra.mxu0 %v1715
      %1738 = vmatprep.subr.bf16.mxu0 0
      %1739 = vmatpush1.bf16.msra.mxu0 %v1716
      %1740 = vmatprep.subr.bf16.mxu0 0
      %1741 = vmatpush1.bf16.msra.mxu0 %v1717
      %1742 = vmatprep.subr.bf16.mxu0 0
      %1743 = vmatpush1.bf16.msra.mxu0 0
      %1744 = vmatprep.subr.bf16.mxu0 0
      %1745 = vmatpush1.bf16.msra.mxu0 0
      %1746 = vmatprep.subr.bf16.mxu0 0
      %1747 = vmatpush1.bf16.msra.mxu0 0
      %1748 = vmatprep.subr.bf16.mxu0 0
      %1749 = vmatpush1.bf16.msra.mxu0 0
      %1750 = vmatprep.subr.bf16.mxu0 0
      %1751 = vmatpush1.bf16.msra.mxu0 0
      %1752 = vmatprep.subr.bf16.mxu0 0
      %1753 = vmatpush1.bf16.msra.mxu0 0
      %1754 = vmatprep.subr.bf16.mxu0 0
      %1755 = vmatpush1.bf16.msra.mxu0 0
      %1756 = vmatprep.subr.bf16.mxu0 0
      %1757 = vmatpush1.bf16.msra.mxu0 0
      %1758 = vmatprep.mubr.bf16.mxu0 0
      %1759 = vmatmul.mubr.bf16.gmra.mrb[0].mxu0 %v1654
      %v1760 = vpop.f32.mrb[0].mxu0
      %v1761 = vadd.f32 %v1676, %v1760
      %v1762 = vpop.f32.mrb[0].mxu0
      %v1763 = vpop.f32.mrb[0].mxu0
      %v1764 = vpop.f32.mrb[0].mxu0
      %1765 = vdwg.mxu0
      %1766 = vst [vmem:[#allocation13] sm:$0xff] %v1761
    $region49: #{tpu_custom_call.1} parent=1 // pred_fallthru
      _
    // Predicated region
    $region50: #{tpu_custom_call.1} parent=1 // pred_check
      _
    $region51: #{tpu_custom_call.1} parent=1 // pred_check_branch
      %1768 = sbr.rel (0) target = $region53
    $region52: #{tpu_custom_call.1} parent=1 // pred_region
      %s1770 = ssub.s32 128, 128
      %1771 = vsyncadd [#allocation7], %s1770
      %s1773 = sshll.u32 [#allocation13], 4
      %s1774 = int_to_ptr.vmem [resolvable:$true] %s1773
      %1776 = dma.vmem_to_hbm [thread:$0]  %s1774, 128, %s6, [#allocation7]
    $region53: #{tpu_custom_call.1} parent=1 // pred_fallthru
      _
    // Predicated region
    $region54: #{tpu_custom_call.1} parent=1 // pred_check
      _
    $region55: #{tpu_custom_call.1} parent=1 // pred_check_branch
      %1778 = sbr.rel (0) target = $region57
    $region56: #{tpu_custom_call.1} parent=1 // pred_region
      %1779 = dma.done [#allocation7], 128
    $region57: #{tpu_custom_call.1} parent=1 // pred_fallthru
      _
    %1780 = vsyncpa [#allocation6], 1
    %1781 = vsyncpa [#allocation9], 1
    %1782 = vsyncpa [#allocation12], 1
    %1783 = vsyncpa [#allocation7], 1

</llo_original>
